<compile_context>
chip_gen: v5e
topology: v5e:2x2
jax: 0.10.0
libtpu: 0.0.40
codegen_flags: <defaults>
</compile_context>

<pallas_src>
import jax
import jax.numpy as jnp
from jax.experimental import pallas as pl
from jax.experimental.pallas import tpu as pltpu


def _pick_plane_block(num_planes, plane_bytes, target_bytes=2 * 1024 * 1024):
    """Pick how many (n, c) planes to process per grid step.

    Targets ~2 MiB input blocks: big enough to sit on the HBM roofline and
    amortize per-step overhead, small enough that double-buffered in/out
    blocks fit the default scoped-VMEM limit on every TPU generation
    (v5e 16 MiB, v6e 32 MiB, v7x 32-of-64 MiB).
    """
    tc = int(max(1, min(num_planes, target_bytes // max(plane_bytes, 1))))
    if num_planes % tc:
        # Prefer an exact divisor close to the target (avoids a ragged final
        # block); otherwise keep the ragged grid (Pallas masks the tail).
        for d in range(tc, 0, -1):
            if num_planes % d == 0:
                if d * 2 >= tc:
                    tc = d
                break
    return tc


def _make_kernel(TC, H, W):
    """Kernel over a (TC, H, W) block -> (TC, H_out, W_out) block."""
    H_out = (H - 1) // 2 + 1
    W_out = (W - 1) // 2 + 1
    Hb, Wb = H // 2, W // 2          # number of complete (even, odd) pairs
    odd_h, odd_w = (H % 2 == 1), (W % 2 == 1)

    def take_even_cols(rows, nrows):
        # rows: (TC, nrows, W) -> (TC, nrows, Wb), keeping columns 0,2,4,...
        r = rows[:, :, :2 * Wb].reshape(TC, nrows, Wb, 2)
        return r[:, :, :, 0]

    def kernel(x_ref, o_ref):
        x = x_ref[...]                                              # (TC, H, W)

        if Hb > 0:
            # Even rows among the first 2*Hb rows (sublane de-interleave).
            rows = x[:, :2 * Hb, :].reshape(TC, Hb, 2, W)[:, :, 0, :]  # (TC,Hb,W)
            if Wb > 0:
                o_ref[:, :Hb, :Wb] = take_even_cols(rows, Hb)
            if odd_w:
                # Last output column comes from input column W-1 (even index).
                o_ref[:, :Hb, Wb:W_out] = rows[:, :, W - 1:W]
        if odd_h:
            # Last output row comes from input row H-1 (even index).
            last = x[:, H - 1:H, :]                                 # (TC, 1, W)
            if Wb > 0:
                o_ref[:, Hb:H_out, :Wb] = take_even_cols(last, 1)
            if odd_w:
                o_ref[:, Hb:H_out, Wb:W_out] = last[:, :, W - 1:W]

    return kernel


def last_level_max_pool(x):
    """Pallas implementation of LastLevelMaxPool.forward.

    Returns a list with a single NCHW array, matching the PyTorch module's
    `[F.max_pool2d(x, kernel_size=1, stride=2, padding=0)]`.
    """
    N, C, H, W = x.shape
    H_out = (H - 1) // 2 + 1
    W_out = (W - 1) // 2 + 1
    NC = N * C

    # Free (metadata-only) reshape; no padding, no extra HBM traffic.
    xf = x.reshape(NC, H, W)

    itemsize = jnp.dtype(x.dtype).itemsize
    TC = _pick_plane_block(NC, H * W * itemsize)
    grid = (pl.cdiv(NC, TC),)

    kernel = _make_kernel(TC, H, W)
    bytes_accessed = NC * (H * W + H_out * W_out) * itemsize

    out = pl.pallas_call(
        kernel,
        out_shape=jax.ShapeDtypeStruct((NC, H_out, W_out), x.dtype),
        grid=grid,
        # Full H/W extents per block -> always tiling-legal, any H/W (odd ok).
        in_specs=[pl.BlockSpec((TC, H, W), lambda i: (i, 0, 0))],
        out_specs=pl.BlockSpec((TC, H_out, W_out), lambda i: (i, 0, 0)),
        compiler_params=pltpu.CompilerParams(
            dimension_semantics=("parallel",)),
        cost_estimate=pl.CostEstimate(
            flops=0, transcendentals=0, bytes_accessed=bytes_accessed),
    )(xf)
    return [out.reshape(N, C, H_out, W_out)]


if __name__ == "__main__":
    key = jax.random.PRNGKey(0)
    x = jax.random.normal(key, (2, 4, 16, 16), dtype=jnp.float32)

    outs = last_level_max_pool(x)
    y = outs[0]
    jax.block_until_ready(y)

    # Reference: max_pool2d(kernel=1, stride=2) == stride-2 subsample.
    ref = x[:, :, ::2, ::2]
    assert y.shape == ref.shape, (y.shape, ref.shape)
    assert y.dtype == x.dtype
    assert jnp.array_equal(y, ref), "mismatch vs. reference subsample"

    print("KERNEL_OK")
</pallas_src>

<mosaic_0001>
module attributes {stable_mosaic.version = 11 : i64} {
  func.func @kernel(%arg0: i32, %arg1: memref<8x16x16xf32, #tpu.memory_space<vmem>>, %arg2: memref<8x8x8xf32, #tpu.memory_space<vmem>>) attributes {dimension_semantics = [#tpu.dimension_semantics<parallel>], iteration_bounds = array<i64: 1>, scalar_prefetch = 0 : i64, scratch_operands = 0 : i64, tpu.core_type = #tpu.core_type<tc>, window_params = [{transform_indices = @transform_0, window_bounds = array<i64: 8, 16, 16>}, {transform_indices = @transform_1, window_bounds = array<i64: 8, 8, 8>}]} {
    %c0 = arith.constant 0 : index
    %c0_0 = arith.constant 0 : index
    %c0_1 = arith.constant 0 : index
    %0 = vector.load %arg1[%c0, %c0_0, %c0_1] : memref<8x16x16xf32, #tpu.memory_space<vmem>>, vector<8x16x16xf32>
    %1 = vector.shape_cast %0 : vector<8x16x16xf32> to vector<8x8x2x16xf32>
    %2 = vector.extract_strided_slice %1 {offsets = [0, 0, 0, 0], sizes = [8, 8, 1, 16], strides = [1, 1, 1, 1]} : vector<8x8x2x16xf32> to vector<8x8x1x16xf32>
    %3 = vector.shape_cast %2 : vector<8x8x1x16xf32> to vector<8x8x16xf32>
    %4 = vector.shape_cast %3 : vector<8x8x16xf32> to vector<8x8x8x2xf32>
    %5 = vector.extract_strided_slice %4 {offsets = [0, 0, 0, 0], sizes = [8, 8, 8, 1], strides = [1, 1, 1, 1]} : vector<8x8x8x2xf32> to vector<8x8x8x1xf32>
    %6 = vector.shape_cast %5 : vector<8x8x8x1xf32> to vector<8x8x8xf32>
    %c0_2 = arith.constant 0 : index
    %c0_3 = arith.constant 0 : index
    %c0_4 = arith.constant 0 : index
    %7 = vector.load %arg2[%c0_2, %c0_3, %c0_4] : memref<8x8x8xf32, #tpu.memory_space<vmem>>, vector<8x8x8xf32>
    tpu.vector_store %arg2[%c0_2, %c0_3, %c0_4], %6 {strides = array<i32>} : memref<8x8x8xf32, #tpu.memory_space<vmem>>, vector<8x8x8xf32>,
    return
  }
  func.func @transform_0(%arg0: i32) -> (i32, i32, i32) {
    %c0_i32 = arith.constant 0 : i32
    %c0_i32_0 = arith.constant 0 : i32
    %c0_i32_1 = arith.constant 0 : i32
    return %arg0, %c0_i32, %c0_i32_0 : i32, i32, i32
  }
  func.func @transform_1(%arg0: i32) -> (i32, i32, i32) {
    %c0_i32 = arith.constant 0 : i32
    %c0_i32_0 = arith.constant 0 : i32
    %c0_i32_1 = arith.constant 0 : i32
    return %arg0, %c0_i32, %c0_i32_0 : i32, i32, i32
  }
}

</mosaic_0001>

<llo_original>
// kernel: tpu_custom_call.1
$region0: #{tpu_custom_call.1}
  #allocation0 [shape = 'u32[]', space=smem, size = 0x4, offset = 0x4, fixed_abs, tag = 'smem constant byte address 0x4 - core index']
  #allocation1 [shape = 'u32[72,128]{1,0:T(1,128)}', space=vmem, size = 0x9000, scoped, tag = 'internal scratch']
  %s0 = inlined_call_operand.hbm [shape: f32[8,16,16], index: 0, kind: input, shape index: {}]
  %s1 = inlined_call_operand.hbm [shape: f32[8,8,8], index: 1, kind: output, shape index: {}]
  %s2 = sld [smem:[#allocation0]]
  $region18: #{tpu_custom_call.1} parent=0
    _
  %s4 = ssub.s32 1, %s2
  %s5 = scalar_select 0, %s4, %s2
  $region1: #{tpu_custom_call.1} parent=0
    #allocation2 [shape = 'u8[65536]{0}', space=vmem, size = 0x10000, scoped, tag = 'input window, operand 0, single buffered']
    #allocation3 [shape = 's32[1]{0}', space=sflag, size = 0x4, scoped, tag = 'scoped memory for tpu_custom_call.1']
    #allocation4 [shape = 's32[1]{0}', space=sflag, size = 0x4, scoped, tag = 'scoped memory for tpu_custom_call.1']
    #allocation5 [shape = 'u8[32768]{0}', space=vmem, size = 0x8000, scoped, tag = 'output window, operand 0, single buffered']
    %6 = vsyncpa [#allocation3], 0
    %7 = vsyncpa [#allocation4], 0
    // Predicated region
    $region2: #{tpu_custom_call.1} parent=1 // pred_check
      _
    $region3: #{tpu_custom_call.1} parent=1 // pred_check_branch
      %9 = sbr.rel (0) target = $region5
    $region4: #{tpu_custom_call.1} parent=1 // pred_region
      %11 = vsyncadd [#allocation3], 0
      %s12 = sshll.u32 %s0, 4
      %s13 = int_to_ptr.hbm [resolvable:$true] %s12
      %s14 = sshll.u32 [#allocation2], 4
      %s15 = int_to_ptr.vmem [resolvable:$true] %s14
      %20 = dma.hbm_to_vmem [thread:$0]  %s13, 2048, %s15, [#allocation3], 128, 128, 8
    $region5: #{tpu_custom_call.1} parent=1 // pred_fallthru
      _
    // Predicated region
    $region6: #{tpu_custom_call.1} parent=1 // pred_check
      _
    $region7: #{tpu_custom_call.1} parent=1 // pred_check_branch
      %22 = sbr.rel (0) target = $region9
    $region8: #{tpu_custom_call.1} parent=1 // pred_region
      %24 = dma.done [#allocation3], 2048
    $region9: #{tpu_custom_call.1} parent=1 // pred_fallthru
      _
    %v25 = vld [vmem:[#allocation2] sm:$0xff]
    %v26 = vld [vmem:[#allocation2 + $0x8] sm:$0xff]
    %v27 = vld [vmem:[#allocation2 + $0x10] sm:$0xff]
    %v28 = vld [vmem:[#allocation2 + $0x18] sm:$0xff]
    %v29 = vld [vmem:[#allocation2 + $0x20] sm:$0xff]
    %v30 = vld [vmem:[#allocation2 + $0x28] sm:$0xff]
    %v31 = vld [vmem:[#allocation2 + $0x30] sm:$0xff]
    %v32 = vld [vmem:[#allocation2 + $0x38] sm:$0xff]
    %v33 = vld [vmem:[#allocation2 + $0x40] sm:$0xff]
    %v34 = vld [vmem:[#allocation2 + $0x48] sm:$0xff]
    %v35 = vld [vmem:[#allocation2 + $0x50] sm:$0xff]
    %v36 = vld [vmem:[#allocation2 + $0x58] sm:$0xff]
    %v37 = vld [vmem:[#allocation2 + $0x60] sm:$0xff]
    %v38 = vld [vmem:[#allocation2 + $0x68] sm:$0xff]
    %v39 = vld [vmem:[#allocation2 + $0x70] sm:$0xff]
    %v40 = vld [vmem:[#allocation2 + $0x78] sm:$0xff]
    %v57 = vrot.slane %v25, 2
    %v58 = vrot.slane %v25, 4
    %v59 = vrot.slane %v25, 6
    %v60 = vrot.slane %v26, 2
    %v61 = vrot.slane %v26, 4
    %v62 = vrot.slane %v26, 6
    %v63 = vrot.slane %v27, 2
    %v64 = vrot.slane %v27, 4
    %v65 = vrot.slane %v27, 6
    %v66 = vrot.slane %v28, 2
    %v67 = vrot.slane %v28, 4
    %v68 = vrot.slane %v28, 6
    %v69 = vrot.slane %v29, 2
    %v70 = vrot.slane %v29, 4
    %v71 = vrot.slane %v29, 6
    %v72 = vrot.slane %v30, 2
    %v73 = vrot.slane %v30, 4
    %v74 = vrot.slane %v30, 6
    %v75 = vrot.slane %v31, 2
    %v76 = vrot.slane %v31, 4
    %v77 = vrot.slane %v31, 6
    %v78 = vrot.slane %v32, 2
    %v79 = vrot.slane %v32, 4
    %v80 = vrot.slane %v32, 6
    %v81 = vrot.slane %v33, 2
    %v82 = vrot.slane %v33, 4
    %v83 = vrot.slane %v33, 6
    %v84 = vrot.slane %v34, 2
    %v85 = vrot.slane %v34, 4
    %v86 = vrot.slane %v34, 6
    %v87 = vrot.slane %v35, 2
    %v88 = vrot.slane %v35, 4
    %v89 = vrot.slane %v35, 6
    %v90 = vrot.slane %v36, 2
    %v91 = vrot.slane %v36, 4
    %v92 = vrot.slane %v36, 6
    %v93 = vrot.slane %v37, 2
    %v94 = vrot.slane %v37, 4
    %v95 = vrot.slane %v37, 6
    %v96 = vrot.slane %v38, 2
    %v97 = vrot.slane %v38, 4
    %v98 = vrot.slane %v38, 6
    %v99 = vrot.slane %v39, 2
    %v100 = vrot.slane %v39, 4
    %v101 = vrot.slane %v39, 6
    %v102 = vrot.slane %v40, 2
    %v103 = vrot.slane %v40, 4
    %v104 = vrot.slane %v40, 6
    %153 = vrot.lane.b32.xlu0 %v25, 126
    %v154 = vpop.permute.xlu0 %153
    %155 = vrot.lane.b32.xlu0 %v57, 126
    %v156 = vpop.permute.xlu0 %155
    %157 = vrot.lane.b32.xlu0 %v58, 126
    %v158 = vpop.permute.xlu0 %157
    %159 = vrot.lane.b32.xlu0 %v59, 126
    %v160 = vpop.permute.xlu0 %159
    %161 = vrot.lane.b32.xlu0 %v26, 126
    %v162 = vpop.permute.xlu0 %161
    %163 = vrot.lane.b32.xlu0 %v60, 126
    %v164 = vpop.permute.xlu0 %163
    %165 = vrot.lane.b32.xlu0 %v61, 126
    %v166 = vpop.permute.xlu0 %165
    %167 = vrot.lane.b32.xlu0 %v62, 126
    %v168 = vpop.permute.xlu0 %167
    %169 = vrot.lane.b32.xlu0 %v27, 126
    %v170 = vpop.permute.xlu0 %169
    %171 = vrot.lane.b32.xlu0 %v63, 126
    %v172 = vpop.permute.xlu0 %171
    %173 = vrot.lane.b32.xlu0 %v64, 126
    %v174 = vpop.permute.xlu0 %173
    %175 = vrot.lane.b32.xlu0 %v65, 126
    %v176 = vpop.permute.xlu0 %175
    %177 = vrot.lane.b32.xlu0 %v28, 126
    %v178 = vpop.permute.xlu0 %177
    %179 = vrot.lane.b32.xlu0 %v66, 126
    %v180 = vpop.permute.xlu0 %179
    %181 = vrot.lane.b32.xlu0 %v67, 126
    %v182 = vpop.permute.xlu0 %181
    %183 = vrot.lane.b32.xlu0 %v68, 126
    %v184 = vpop.permute.xlu0 %183
    %185 = vrot.lane.b32.xlu0 %v29, 126
    %v186 = vpop.permute.xlu0 %185
    %187 = vrot.lane.b32.xlu0 %v69, 126
    %v188 = vpop.permute.xlu0 %187
    %189 = vrot.lane.b32.xlu0 %v70, 126
    %v190 = vpop.permute.xlu0 %189
    %191 = vrot.lane.b32.xlu0 %v71, 126
    %v192 = vpop.permute.xlu0 %191
    %193 = vrot.lane.b32.xlu0 %v30, 126
    %v194 = vpop.permute.xlu0 %193
    %195 = vrot.lane.b32.xlu0 %v72, 126
    %v196 = vpop.permute.xlu0 %195
    %197 = vrot.lane.b32.xlu0 %v73, 126
    %v198 = vpop.permute.xlu0 %197
    %199 = vrot.lane.b32.xlu0 %v74, 126
    %v200 = vpop.permute.xlu0 %199
    %201 = vrot.lane.b32.xlu0 %v31, 126
    %v202 = vpop.permute.xlu0 %201
    %203 = vrot.lane.b32.xlu0 %v75, 126
    %v204 = vpop.permute.xlu0 %203
    %205 = vrot.lane.b32.xlu0 %v76, 126
    %v206 = vpop.permute.xlu0 %205
    %207 = vrot.lane.b32.xlu0 %v77, 126
    %v208 = vpop.permute.xlu0 %207
    %209 = vrot.lane.b32.xlu0 %v32, 126
    %v210 = vpop.permute.xlu0 %209
    %211 = vrot.lane.b32.xlu0 %v78, 126
    %v212 = vpop.permute.xlu0 %211
    %213 = vrot.lane.b32.xlu0 %v79, 126
    %v214 = vpop.permute.xlu0 %213
    %215 = vrot.lane.b32.xlu0 %v80, 126
    %v216 = vpop.permute.xlu0 %215
    %217 = vrot.lane.b32.xlu0 %v33, 126
    %v218 = vpop.permute.xlu0 %217
    %219 = vrot.lane.b32.xlu0 %v81, 126
    %v220 = vpop.permute.xlu0 %219
    %221 = vrot.lane.b32.xlu0 %v82, 126
    %v222 = vpop.permute.xlu0 %221
    %223 = vrot.lane.b32.xlu0 %v83, 126
    %v224 = vpop.permute.xlu0 %223
    %225 = vrot.lane.b32.xlu0 %v34, 126
    %v226 = vpop.permute.xlu0 %225
    %227 = vrot.lane.b32.xlu0 %v84, 126
    %v228 = vpop.permute.xlu0 %227
    %229 = vrot.lane.b32.xlu0 %v85, 126
    %v230 = vpop.permute.xlu0 %229
    %231 = vrot.lane.b32.xlu0 %v86, 126
    %v232 = vpop.permute.xlu0 %231
    %233 = vrot.lane.b32.xlu0 %v35, 126
    %v234 = vpop.permute.xlu0 %233
    %235 = vrot.lane.b32.xlu0 %v87, 126
    %v236 = vpop.permute.xlu0 %235
    %237 = vrot.lane.b32.xlu0 %v88, 126
    %v238 = vpop.permute.xlu0 %237
    %239 = vrot.lane.b32.xlu0 %v89, 126
    %v240 = vpop.permute.xlu0 %239
    %241 = vrot.lane.b32.xlu0 %v36, 126
    %v242 = vpop.permute.xlu0 %241
    %243 = vrot.lane.b32.xlu0 %v90, 126
    %v244 = vpop.permute.xlu0 %243
    %245 = vrot.lane.b32.xlu0 %v91, 126
    %v246 = vpop.permute.xlu0 %245
    %247 = vrot.lane.b32.xlu0 %v92, 126
    %v248 = vpop.permute.xlu0 %247
    %249 = vrot.lane.b32.xlu0 %v37, 126
    %v250 = vpop.permute.xlu0 %249
    %251 = vrot.lane.b32.xlu0 %v93, 126
    %v252 = vpop.permute.xlu0 %251
    %253 = vrot.lane.b32.xlu0 %v94, 126
    %v254 = vpop.permute.xlu0 %253
    %255 = vrot.lane.b32.xlu0 %v95, 126
    %v256 = vpop.permute.xlu0 %255
    %257 = vrot.lane.b32.xlu0 %v38, 126
    %v258 = vpop.permute.xlu0 %257
    %259 = vrot.lane.b32.xlu0 %v96, 126
    %v260 = vpop.permute.xlu0 %259
    %261 = vrot.lane.b32.xlu0 %v97, 126
    %v262 = vpop.permute.xlu0 %261
    %263 = vrot.lane.b32.xlu0 %v98, 126
    %v264 = vpop.permute.xlu0 %263
    %265 = vrot.lane.b32.xlu0 %v39, 126
    %v266 = vpop.permute.xlu0 %265
    %267 = vrot.lane.b32.xlu0 %v99, 126
    %v268 = vpop.permute.xlu0 %267
    %269 = vrot.lane.b32.xlu0 %v100, 126
    %v270 = vpop.permute.xlu0 %269
    %271 = vrot.lane.b32.xlu0 %v101, 126
    %v272 = vpop.permute.xlu0 %271
    %273 = vrot.lane.b32.xlu0 %v40, 126
    %v274 = vpop.permute.xlu0 %273
    %275 = vrot.lane.b32.xlu0 %v102, 126
    %v276 = vpop.permute.xlu0 %275
    %277 = vrot.lane.b32.xlu0 %v103, 126
    %v278 = vpop.permute.xlu0 %277
    %279 = vrot.lane.b32.xlu0 %v104, 126
    %v280 = vpop.permute.xlu0 %279
    %345 = vrot.lane.b32.xlu0 %v25, 124
    %v346 = vpop.permute.xlu0 %345
    %347 = vrot.lane.b32.xlu0 %v57, 124
    %v348 = vpop.permute.xlu0 %347
    %349 = vrot.lane.b32.xlu0 %v58, 124
    %v350 = vpop.permute.xlu0 %349
    %351 = vrot.lane.b32.xlu0 %v59, 124
    %v352 = vpop.permute.xlu0 %351
    %353 = vrot.lane.b32.xlu0 %v26, 124
    %v354 = vpop.permute.xlu0 %353
    %355 = vrot.lane.b32.xlu0 %v60, 124
    %v356 = vpop.permute.xlu0 %355
    %357 = vrot.lane.b32.xlu0 %v61, 124
    %v358 = vpop.permute.xlu0 %357
    %359 = vrot.lane.b32.xlu0 %v62, 124
    %v360 = vpop.permute.xlu0 %359
    %361 = vrot.lane.b32.xlu0 %v27, 124
    %v362 = vpop.permute.xlu0 %361
    %363 = vrot.lane.b32.xlu0 %v63, 124
    %v364 = vpop.permute.xlu0 %363
    %365 = vrot.lane.b32.xlu0 %v64, 124
    %v366 = vpop.permute.xlu0 %365
    %367 = vrot.lane.b32.xlu0 %v65, 124
    %v368 = vpop.permute.xlu0 %367
    %369 = vrot.lane.b32.xlu0 %v28, 124
    %v370 = vpop.permute.xlu0 %369
    %371 = vrot.lane.b32.xlu0 %v66, 124
    %v372 = vpop.permute.xlu0 %371
    %373 = vrot.lane.b32.xlu0 %v67, 124
    %v374 = vpop.permute.xlu0 %373
    %375 = vrot.lane.b32.xlu0 %v68, 124
    %v376 = vpop.permute.xlu0 %375
    %377 = vrot.lane.b32.xlu0 %v29, 124
    %v378 = vpop.permute.xlu0 %377
    %379 = vrot.lane.b32.xlu0 %v69, 124
    %v380 = vpop.permute.xlu0 %379
    %381 = vrot.lane.b32.xlu0 %v70, 124
    %v382 = vpop.permute.xlu0 %381
    %383 = vrot.lane.b32.xlu0 %v71, 124
    %v384 = vpop.permute.xlu0 %383
    %385 = vrot.lane.b32.xlu0 %v30, 124
    %v386 = vpop.permute.xlu0 %385
    %387 = vrot.lane.b32.xlu0 %v72, 124
    %v388 = vpop.permute.xlu0 %387
    %389 = vrot.lane.b32.xlu0 %v73, 124
    %v390 = vpop.permute.xlu0 %389
    %391 = vrot.lane.b32.xlu0 %v74, 124
    %v392 = vpop.permute.xlu0 %391
    %393 = vrot.lane.b32.xlu0 %v31, 124
    %v394 = vpop.permute.xlu0 %393
    %395 = vrot.lane.b32.xlu0 %v75, 124
    %v396 = vpop.permute.xlu0 %395
    %397 = vrot.lane.b32.xlu0 %v76, 124
    %v398 = vpop.permute.xlu0 %397
    %399 = vrot.lane.b32.xlu0 %v77, 124
    %v400 = vpop.permute.xlu0 %399
    %401 = vrot.lane.b32.xlu0 %v32, 124
    %v402 = vpop.permute.xlu0 %401
    %403 = vrot.lane.b32.xlu0 %v78, 124
    %v404 = vpop.permute.xlu0 %403
    %405 = vrot.lane.b32.xlu0 %v79, 124
    %v406 = vpop.permute.xlu0 %405
    %407 = vrot.lane.b32.xlu0 %v80, 124
    %v408 = vpop.permute.xlu0 %407
    %409 = vrot.lane.b32.xlu0 %v33, 124
    %v410 = vpop.permute.xlu0 %409
    %411 = vrot.lane.b32.xlu0 %v81, 124
    %v412 = vpop.permute.xlu0 %411
    %413 = vrot.lane.b32.xlu0 %v82, 124
    %v414 = vpop.permute.xlu0 %413
    %415 = vrot.lane.b32.xlu0 %v83, 124
    %v416 = vpop.permute.xlu0 %415
    %417 = vrot.lane.b32.xlu0 %v34, 124
    %v418 = vpop.permute.xlu0 %417
    %419 = vrot.lane.b32.xlu0 %v84, 124
    %v420 = vpop.permute.xlu0 %419
    %421 = vrot.lane.b32.xlu0 %v85, 124
    %v422 = vpop.permute.xlu0 %421
    %423 = vrot.lane.b32.xlu0 %v86, 124
    %v424 = vpop.permute.xlu0 %423
    %425 = vrot.lane.b32.xlu0 %v35, 124
    %v426 = vpop.permute.xlu0 %425
    %427 = vrot.lane.b32.xlu0 %v87, 124
    %v428 = vpop.permute.xlu0 %427
    %429 = vrot.lane.b32.xlu0 %v88, 124
    %v430 = vpop.permute.xlu0 %429
    %431 = vrot.lane.b32.xlu0 %v89, 124
    %v432 = vpop.permute.xlu0 %431
    %433 = vrot.lane.b32.xlu0 %v36, 124
    %v434 = vpop.permute.xlu0 %433
    %435 = vrot.lane.b32.xlu0 %v90, 124
    %v436 = vpop.permute.xlu0 %435
    %437 = vrot.lane.b32.xlu0 %v91, 124
    %v438 = vpop.permute.xlu0 %437
    %439 = vrot.lane.b32.xlu0 %v92, 124
    %v440 = vpop.permute.xlu0 %439
    %441 = vrot.lane.b32.xlu0 %v37, 124
    %v442 = vpop.permute.xlu0 %441
    %443 = vrot.lane.b32.xlu0 %v93, 124
    %v444 = vpop.permute.xlu0 %443
    %445 = vrot.lane.b32.xlu0 %v94, 124
    %v446 = vpop.permute.xlu0 %445
    %447 = vrot.lane.b32.xlu0 %v95, 124
    %v448 = vpop.permute.xlu0 %447
    %449 = vrot.lane.b32.xlu0 %v38, 124
    %v450 = vpop.permute.xlu0 %449
    %451 = vrot.lane.b32.xlu0 %v96, 124
    %v452 = vpop.permute.xlu0 %451
    %453 = vrot.lane.b32.xlu0 %v97, 124
    %v454 = vpop.permute.xlu0 %453
    %455 = vrot.lane.b32.xlu0 %v98, 124
    %v456 = vpop.permute.xlu0 %455
    %457 = vrot.lane.b32.xlu0 %v39, 124
    %v458 = vpop.permute.xlu0 %457
    %459 = vrot.lane.b32.xlu0 %v99, 124
    %v460 = vpop.permute.xlu0 %459
    %461 = vrot.lane.b32.xlu0 %v100, 124
    %v462 = vpop.permute.xlu0 %461
    %463 = vrot.lane.b32.xlu0 %v101, 124
    %v464 = vpop.permute.xlu0 %463
    %465 = vrot.lane.b32.xlu0 %v40, 124
    %v466 = vpop.permute.xlu0 %465
    %467 = vrot.lane.b32.xlu0 %v102, 124
    %v468 = vpop.permute.xlu0 %467
    %469 = vrot.lane.b32.xlu0 %v103, 124
    %v470 = vpop.permute.xlu0 %469
    %471 = vrot.lane.b32.xlu0 %v104, 124
    %v472 = vpop.permute.xlu0 %471
    %537 = vrot.lane.b32.xlu0 %v25, 122
    %v538 = vpop.permute.xlu0 %537
    %539 = vrot.lane.b32.xlu0 %v57, 122
    %v540 = vpop.permute.xlu0 %539
    %541 = vrot.lane.b32.xlu0 %v58, 122
    %v542 = vpop.permute.xlu0 %541
    %543 = vrot.lane.b32.xlu0 %v59, 122
    %v544 = vpop.permute.xlu0 %543
    %545 = vrot.lane.b32.xlu0 %v26, 122
    %v546 = vpop.permute.xlu0 %545
    %547 = vrot.lane.b32.xlu0 %v60, 122
    %v548 = vpop.permute.xlu0 %547
    %549 = vrot.lane.b32.xlu0 %v61, 122
    %v550 = vpop.permute.xlu0 %549
    %551 = vrot.lane.b32.xlu0 %v62, 122
    %v552 = vpop.permute.xlu0 %551
    %553 = vrot.lane.b32.xlu0 %v27, 122
    %v554 = vpop.permute.xlu0 %553
    %555 = vrot.lane.b32.xlu0 %v63, 122
    %v556 = vpop.permute.xlu0 %555
    %557 = vrot.lane.b32.xlu0 %v64, 122
    %v558 = vpop.permute.xlu0 %557
    %559 = vrot.lane.b32.xlu0 %v65, 122
    %v560 = vpop.permute.xlu0 %559
    %561 = vrot.lane.b32.xlu0 %v28, 122
    %v562 = vpop.permute.xlu0 %561
    %563 = vrot.lane.b32.xlu0 %v66, 122
    %v564 = vpop.permute.xlu0 %563
    %565 = vrot.lane.b32.xlu0 %v67, 122
    %v566 = vpop.permute.xlu0 %565
    %567 = vrot.lane.b32.xlu0 %v68, 122
    %v568 = vpop.permute.xlu0 %567
    %569 = vrot.lane.b32.xlu0 %v29, 122
    %v570 = vpop.permute.xlu0 %569
    %571 = vrot.lane.b32.xlu0 %v69, 122
    %v572 = vpop.permute.xlu0 %571
    %573 = vrot.lane.b32.xlu0 %v70, 122
    %v574 = vpop.permute.xlu0 %573
    %575 = vrot.lane.b32.xlu0 %v71, 122
    %v576 = vpop.permute.xlu0 %575
    %577 = vrot.lane.b32.xlu0 %v30, 122
    %v578 = vpop.permute.xlu0 %577
    %579 = vrot.lane.b32.xlu0 %v72, 122
    %v580 = vpop.permute.xlu0 %579
    %581 = vrot.lane.b32.xlu0 %v73, 122
    %v582 = vpop.permute.xlu0 %581
    %583 = vrot.lane.b32.xlu0 %v74, 122
    %v584 = vpop.permute.xlu0 %583
    %585 = vrot.lane.b32.xlu0 %v31, 122
    %v586 = vpop.permute.xlu0 %585
    %587 = vrot.lane.b32.xlu0 %v75, 122
    %v588 = vpop.permute.xlu0 %587
    %589 = vrot.lane.b32.xlu0 %v76, 122
    %v590 = vpop.permute.xlu0 %589
    %591 = vrot.lane.b32.xlu0 %v77, 122
    %v592 = vpop.permute.xlu0 %591
    %593 = vrot.lane.b32.xlu0 %v32, 122
    %v594 = vpop.permute.xlu0 %593
    %595 = vrot.lane.b32.xlu0 %v78, 122
    %v596 = vpop.permute.xlu0 %595
    %597 = vrot.lane.b32.xlu0 %v79, 122
    %v598 = vpop.permute.xlu0 %597
    %599 = vrot.lane.b32.xlu0 %v80, 122
    %v600 = vpop.permute.xlu0 %599
    %601 = vrot.lane.b32.xlu0 %v33, 122
    %v602 = vpop.permute.xlu0 %601
    %603 = vrot.lane.b32.xlu0 %v81, 122
    %v604 = vpop.permute.xlu0 %603
    %605 = vrot.lane.b32.xlu0 %v82, 122
    %v606 = vpop.permute.xlu0 %605
    %607 = vrot.lane.b32.xlu0 %v83, 122
    %v608 = vpop.permute.xlu0 %607
    %609 = vrot.lane.b32.xlu0 %v34, 122
    %v610 = vpop.permute.xlu0 %609
    %611 = vrot.lane.b32.xlu0 %v84, 122
    %v612 = vpop.permute.xlu0 %611
    %613 = vrot.lane.b32.xlu0 %v85, 122
    %v614 = vpop.permute.xlu0 %613
    %615 = vrot.lane.b32.xlu0 %v86, 122
    %v616 = vpop.permute.xlu0 %615
    %617 = vrot.lane.b32.xlu0 %v35, 122
    %v618 = vpop.permute.xlu0 %617
    %619 = vrot.lane.b32.xlu0 %v87, 122
    %v620 = vpop.permute.xlu0 %619
    %621 = vrot.lane.b32.xlu0 %v88, 122
    %v622 = vpop.permute.xlu0 %621
    %623 = vrot.lane.b32.xlu0 %v89, 122
    %v624 = vpop.permute.xlu0 %623
    %625 = vrot.lane.b32.xlu0 %v36, 122
    %v626 = vpop.permute.xlu0 %625
    %627 = vrot.lane.b32.xlu0 %v90, 122
    %v628 = vpop.permute.xlu0 %627
    %629 = vrot.lane.b32.xlu0 %v91, 122
    %v630 = vpop.permute.xlu0 %629
    %631 = vrot.lane.b32.xlu0 %v92, 122
    %v632 = vpop.permute.xlu0 %631
    %633 = vrot.lane.b32.xlu0 %v37, 122
    %v634 = vpop.permute.xlu0 %633
    %635 = vrot.lane.b32.xlu0 %v93, 122
    %v636 = vpop.permute.xlu0 %635
    %637 = vrot.lane.b32.xlu0 %v94, 122
    %v638 = vpop.permute.xlu0 %637
    %639 = vrot.lane.b32.xlu0 %v95, 122
    %v640 = vpop.permute.xlu0 %639
    %641 = vrot.lane.b32.xlu0 %v38, 122
    %v642 = vpop.permute.xlu0 %641
    %643 = vrot.lane.b32.xlu0 %v96, 122
    %v644 = vpop.permute.xlu0 %643
    %645 = vrot.lane.b32.xlu0 %v97, 122
    %v646 = vpop.permute.xlu0 %645
    %647 = vrot.lane.b32.xlu0 %v98, 122
    %v648 = vpop.permute.xlu0 %647
    %649 = vrot.lane.b32.xlu0 %v39, 122
    %v650 = vpop.permute.xlu0 %649
    %651 = vrot.lane.b32.xlu0 %v99, 122
    %v652 = vpop.permute.xlu0 %651
    %653 = vrot.lane.b32.xlu0 %v100, 122
    %v654 = vpop.permute.xlu0 %653
    %655 = vrot.lane.b32.xlu0 %v101, 122
    %v656 = vpop.permute.xlu0 %655
    %657 = vrot.lane.b32.xlu0 %v40, 122
    %v658 = vpop.permute.xlu0 %657
    %659 = vrot.lane.b32.xlu0 %v102, 122
    %v660 = vpop.permute.xlu0 %659
    %661 = vrot.lane.b32.xlu0 %v103, 122
    %v662 = vpop.permute.xlu0 %661
    %663 = vrot.lane.b32.xlu0 %v104, 122
    %v664 = vpop.permute.xlu0 %663
    %729 = vrot.lane.b32.xlu0 %v25, 120
    %v730 = vpop.permute.xlu0 %729
    %731 = vrot.lane.b32.xlu0 %v57, 120
    %v732 = vpop.permute.xlu0 %731
    %733 = vrot.lane.b32.xlu0 %v58, 120
    %v734 = vpop.permute.xlu0 %733
    %735 = vrot.lane.b32.xlu0 %v59, 120
    %v736 = vpop.permute.xlu0 %735
    %737 = vrot.lane.b32.xlu0 %v26, 120
    %v738 = vpop.permute.xlu0 %737
    %739 = vrot.lane.b32.xlu0 %v60, 120
    %v740 = vpop.permute.xlu0 %739
    %741 = vrot.lane.b32.xlu0 %v61, 120
    %v742 = vpop.permute.xlu0 %741
    %743 = vrot.lane.b32.xlu0 %v62, 120
    %v744 = vpop.permute.xlu0 %743
    %745 = vrot.lane.b32.xlu0 %v27, 120
    %v746 = vpop.permute.xlu0 %745
    %747 = vrot.lane.b32.xlu0 %v63, 120
    %v748 = vpop.permute.xlu0 %747
    %749 = vrot.lane.b32.xlu0 %v64, 120
    %v750 = vpop.permute.xlu0 %749
    %751 = vrot.lane.b32.xlu0 %v65, 120
    %v752 = vpop.permute.xlu0 %751
    %753 = vrot.lane.b32.xlu0 %v28, 120
    %v754 = vpop.permute.xlu0 %753
    %755 = vrot.lane.b32.xlu0 %v66, 120
    %v756 = vpop.permute.xlu0 %755
    %757 = vrot.lane.b32.xlu0 %v67, 120
    %v758 = vpop.permute.xlu0 %757
    %759 = vrot.lane.b32.xlu0 %v68, 120
    %v760 = vpop.permute.xlu0 %759
    %761 = vrot.lane.b32.xlu0 %v29, 120
    %v762 = vpop.permute.xlu0 %761
    %763 = vrot.lane.b32.xlu0 %v69, 120
    %v764 = vpop.permute.xlu0 %763
    %765 = vrot.lane.b32.xlu0 %v70, 120
    %v766 = vpop.permute.xlu0 %765
    %767 = vrot.lane.b32.xlu0 %v71, 120
    %v768 = vpop.permute.xlu0 %767
    %769 = vrot.lane.b32.xlu0 %v30, 120
    %v770 = vpop.permute.xlu0 %769
    %771 = vrot.lane.b32.xlu0 %v72, 120
    %v772 = vpop.permute.xlu0 %771
    %773 = vrot.lane.b32.xlu0 %v73, 120
    %v774 = vpop.permute.xlu0 %773
    %775 = vrot.lane.b32.xlu0 %v74, 120
    %v776 = vpop.permute.xlu0 %775
    %777 = vrot.lane.b32.xlu0 %v31, 120
    %v778 = vpop.permute.xlu0 %777
    %779 = vrot.lane.b32.xlu0 %v75, 120
    %v780 = vpop.permute.xlu0 %779
    %781 = vrot.lane.b32.xlu0 %v76, 120
    %v782 = vpop.permute.xlu0 %781
    %783 = vrot.lane.b32.xlu0 %v77, 120
    %v784 = vpop.permute.xlu0 %783
    %785 = vrot.lane.b32.xlu0 %v32, 120
    %v786 = vpop.permute.xlu0 %785
    %787 = vrot.lane.b32.xlu0 %v78, 120
    %v788 = vpop.permute.xlu0 %787
    %789 = vrot.lane.b32.xlu0 %v79, 120
    %v790 = vpop.permute.xlu0 %789
    %791 = vrot.lane.b32.xlu0 %v80, 120
    %v792 = vpop.permute.xlu0 %791
    %793 = vrot.lane.b32.xlu0 %v33, 120
    %v794 = vpop.permute.xlu0 %793
    %795 = vrot.lane.b32.xlu0 %v81, 120
    %v796 = vpop.permute.xlu0 %795
    %797 = vrot.lane.b32.xlu0 %v82, 120
    %v798 = vpop.permute.xlu0 %797
    %799 = vrot.lane.b32.xlu0 %v83, 120
    %v800 = vpop.permute.xlu0 %799
    %801 = vrot.lane.b32.xlu0 %v34, 120
    %v802 = vpop.permute.xlu0 %801
    %803 = vrot.lane.b32.xlu0 %v84, 120
    %v804 = vpop.permute.xlu0 %803
    %805 = vrot.lane.b32.xlu0 %v85, 120
    %v806 = vpop.permute.xlu0 %805
    %807 = vrot.lane.b32.xlu0 %v86, 120
    %v808 = vpop.permute.xlu0 %807
    %809 = vrot.lane.b32.xlu0 %v35, 120
    %v810 = vpop.permute.xlu0 %809
    %811 = vrot.lane.b32.xlu0 %v87, 120
    %v812 = vpop.permute.xlu0 %811
    %813 = vrot.lane.b32.xlu0 %v88, 120
    %v814 = vpop.permute.xlu0 %813
    %815 = vrot.lane.b32.xlu0 %v89, 120
    %v816 = vpop.permute.xlu0 %815
    %817 = vrot.lane.b32.xlu0 %v36, 120
    %v818 = vpop.permute.xlu0 %817
    %819 = vrot.lane.b32.xlu0 %v90, 120
    %v820 = vpop.permute.xlu0 %819
    %821 = vrot.lane.b32.xlu0 %v91, 120
    %v822 = vpop.permute.xlu0 %821
    %823 = vrot.lane.b32.xlu0 %v92, 120
    %v824 = vpop.permute.xlu0 %823
    %825 = vrot.lane.b32.xlu0 %v37, 120
    %v826 = vpop.permute.xlu0 %825
    %827 = vrot.lane.b32.xlu0 %v93, 120
    %v828 = vpop.permute.xlu0 %827
    %829 = vrot.lane.b32.xlu0 %v94, 120
    %v830 = vpop.permute.xlu0 %829
    %831 = vrot.lane.b32.xlu0 %v95, 120
    %v832 = vpop.permute.xlu0 %831
    %833 = vrot.lane.b32.xlu0 %v38, 120
    %v834 = vpop.permute.xlu0 %833
    %835 = vrot.lane.b32.xlu0 %v96, 120
    %v836 = vpop.permute.xlu0 %835
    %837 = vrot.lane.b32.xlu0 %v97, 120
    %v838 = vpop.permute.xlu0 %837
    %839 = vrot.lane.b32.xlu0 %v98, 120
    %v840 = vpop.permute.xlu0 %839
    %841 = vrot.lane.b32.xlu0 %v39, 120
    %v842 = vpop.permute.xlu0 %841
    %843 = vrot.lane.b32.xlu0 %v99, 120
    %v844 = vpop.permute.xlu0 %843
    %845 = vrot.lane.b32.xlu0 %v100, 120
    %v846 = vpop.permute.xlu0 %845
    %847 = vrot.lane.b32.xlu0 %v101, 120
    %v848 = vpop.permute.xlu0 %847
    %849 = vrot.lane.b32.xlu0 %v40, 120
    %v850 = vpop.permute.xlu0 %849
    %851 = vrot.lane.b32.xlu0 %v102, 120
    %v852 = vpop.permute.xlu0 %851
    %853 = vrot.lane.b32.xlu0 %v103, 120
    %v854 = vpop.permute.xlu0 %853
    %855 = vrot.lane.b32.xlu0 %v104, 120
    %v856 = vpop.permute.xlu0 %855
    %921 = vrot.lane.b32.xlu0 %v25, 118
    %v922 = vpop.permute.xlu0 %921
    %923 = vrot.lane.b32.xlu0 %v57, 118
    %v924 = vpop.permute.xlu0 %923
    %925 = vrot.lane.b32.xlu0 %v58, 118
    %v926 = vpop.permute.xlu0 %925
    %927 = vrot.lane.b32.xlu0 %v59, 118
    %v928 = vpop.permute.xlu0 %927
    %929 = vrot.lane.b32.xlu0 %v26, 118
    %v930 = vpop.permute.xlu0 %929
    %931 = vrot.lane.b32.xlu0 %v60, 118
    %v932 = vpop.permute.xlu0 %931
    %933 = vrot.lane.b32.xlu0 %v61, 118
    %v934 = vpop.permute.xlu0 %933
    %935 = vrot.lane.b32.xlu0 %v62, 118
    %v936 = vpop.permute.xlu0 %935
    %937 = vrot.lane.b32.xlu0 %v27, 118
    %v938 = vpop.permute.xlu0 %937
    %939 = vrot.lane.b32.xlu0 %v63, 118
    %v940 = vpop.permute.xlu0 %939
    %941 = vrot.lane.b32.xlu0 %v64, 118
    %v942 = vpop.permute.xlu0 %941
    %943 = vrot.lane.b32.xlu0 %v65, 118
    %v944 = vpop.permute.xlu0 %943
    %945 = vrot.lane.b32.xlu0 %v28, 118
    %v946 = vpop.permute.xlu0 %945
    %947 = vrot.lane.b32.xlu0 %v66, 118
    %v948 = vpop.permute.xlu0 %947
    %949 = vrot.lane.b32.xlu0 %v67, 118
    %v950 = vpop.permute.xlu0 %949
    %951 = vrot.lane.b32.xlu0 %v68, 118
    %v952 = vpop.permute.xlu0 %951
    %953 = vrot.lane.b32.xlu0 %v29, 118
    %v954 = vpop.permute.xlu0 %953
    %955 = vrot.lane.b32.xlu0 %v69, 118
    %v956 = vpop.permute.xlu0 %955
    %957 = vrot.lane.b32.xlu0 %v70, 118
    %v958 = vpop.permute.xlu0 %957
    %959 = vrot.lane.b32.xlu0 %v71, 118
    %v960 = vpop.permute.xlu0 %959
    %961 = vrot.lane.b32.xlu0 %v30, 118
    %v962 = vpop.permute.xlu0 %961
    %963 = vrot.lane.b32.xlu0 %v72, 118
    %v964 = vpop.permute.xlu0 %963
    %965 = vrot.lane.b32.xlu0 %v73, 118
    %v966 = vpop.permute.xlu0 %965
    %967 = vrot.lane.b32.xlu0 %v74, 118
    %v968 = vpop.permute.xlu0 %967
    %969 = vrot.lane.b32.xlu0 %v31, 118
    %v970 = vpop.permute.xlu0 %969
    %971 = vrot.lane.b32.xlu0 %v75, 118
    %v972 = vpop.permute.xlu0 %971
    %973 = vrot.lane.b32.xlu0 %v76, 118
    %v974 = vpop.permute.xlu0 %973
    %975 = vrot.lane.b32.xlu0 %v77, 118
    %v976 = vpop.permute.xlu0 %975
    %977 = vrot.lane.b32.xlu0 %v32, 118
    %v978 = vpop.permute.xlu0 %977
    %979 = vrot.lane.b32.xlu0 %v78, 118
    %v980 = vpop.permute.xlu0 %979
    %981 = vrot.lane.b32.xlu0 %v79, 118
    %v982 = vpop.permute.xlu0 %981
    %983 = vrot.lane.b32.xlu0 %v80, 118
    %v984 = vpop.permute.xlu0 %983
    %985 = vrot.lane.b32.xlu0 %v33, 118
    %v986 = vpop.permute.xlu0 %985
    %987 = vrot.lane.b32.xlu0 %v81, 118
    %v988 = vpop.permute.xlu0 %987
    %989 = vrot.lane.b32.xlu0 %v82, 118
    %v990 = vpop.permute.xlu0 %989
    %991 = vrot.lane.b32.xlu0 %v83, 118
    %v992 = vpop.permute.xlu0 %991
    %993 = vrot.lane.b32.xlu0 %v34, 118
    %v994 = vpop.permute.xlu0 %993
    %995 = vrot.lane.b32.xlu0 %v84, 118
    %v996 = vpop.permute.xlu0 %995
    %997 = vrot.lane.b32.xlu0 %v85, 118
    %v998 = vpop.permute.xlu0 %997
    %999 = vrot.lane.b32.xlu0 %v86, 118
    %v1000 = vpop.permute.xlu0 %999
    %1001 = vrot.lane.b32.xlu0 %v35, 118
    %v1002 = vpop.permute.xlu0 %1001
    %1003 = vrot.lane.b32.xlu0 %v87, 118
    %v1004 = vpop.permute.xlu0 %1003
    %1005 = vrot.lane.b32.xlu0 %v88, 118
    %v1006 = vpop.permute.xlu0 %1005
    %1007 = vrot.lane.b32.xlu0 %v89, 118
    %v1008 = vpop.permute.xlu0 %1007
    %1009 = vrot.lane.b32.xlu0 %v36, 118
    %v1010 = vpop.permute.xlu0 %1009
    %1011 = vrot.lane.b32.xlu0 %v90, 118
    %v1012 = vpop.permute.xlu0 %1011
    %1013 = vrot.lane.b32.xlu0 %v91, 118
    %v1014 = vpop.permute.xlu0 %1013
    %1015 = vrot.lane.b32.xlu0 %v92, 118
    %v1016 = vpop.permute.xlu0 %1015
    %1017 = vrot.lane.b32.xlu0 %v37, 118
    %v1018 = vpop.permute.xlu0 %1017
    %1019 = vrot.lane.b32.xlu0 %v93, 118
    %v1020 = vpop.permute.xlu0 %1019
    %1021 = vrot.lane.b32.xlu0 %v94, 118
    %v1022 = vpop.permute.xlu0 %1021
    %1023 = vrot.lane.b32.xlu0 %v95, 118
    %v1024 = vpop.permute.xlu0 %1023
    %1025 = vrot.lane.b32.xlu0 %v38, 118
    %v1026 = vpop.permute.xlu0 %1025
    %1027 = vrot.lane.b32.xlu0 %v96, 118
    %v1028 = vpop.permute.xlu0 %1027
    %1029 = vrot.lane.b32.xlu0 %v97, 118
    %v1030 = vpop.permute.xlu0 %1029
    %1031 = vrot.lane.b32.xlu0 %v98, 118
    %v1032 = vpop.permute.xlu0 %1031
    %1033 = vrot.lane.b32.xlu0 %v39, 118
    %v1034 = vpop.permute.xlu0 %1033
    %1035 = vrot.lane.b32.xlu0 %v99, 118
    %v1036 = vpop.permute.xlu0 %1035
    %1037 = vrot.lane.b32.xlu0 %v100, 118
    %v1038 = vpop.permute.xlu0 %1037
    %1039 = vrot.lane.b32.xlu0 %v101, 118
    %v1040 = vpop.permute.xlu0 %1039
    %1041 = vrot.lane.b32.xlu0 %v40, 118
    %v1042 = vpop.permute.xlu0 %1041
    %1043 = vrot.lane.b32.xlu0 %v102, 118
    %v1044 = vpop.permute.xlu0 %1043
    %1045 = vrot.lane.b32.xlu0 %v103, 118
    %v1046 = vpop.permute.xlu0 %1045
    %1047 = vrot.lane.b32.xlu0 %v104, 118
    %v1048 = vpop.permute.xlu0 %1047
    %1113 = vrot.lane.b32.xlu0 %v25, 116
    %v1114 = vpop.permute.xlu0 %1113
    %1115 = vrot.lane.b32.xlu0 %v57, 116
    %v1116 = vpop.permute.xlu0 %1115
    %1117 = vrot.lane.b32.xlu0 %v58, 116
    %v1118 = vpop.permute.xlu0 %1117
    %1119 = vrot.lane.b32.xlu0 %v59, 116
    %v1120 = vpop.permute.xlu0 %1119
    %1121 = vrot.lane.b32.xlu0 %v26, 116
    %v1122 = vpop.permute.xlu0 %1121
    %1123 = vrot.lane.b32.xlu0 %v60, 116
    %v1124 = vpop.permute.xlu0 %1123
    %1125 = vrot.lane.b32.xlu0 %v61, 116
    %v1126 = vpop.permute.xlu0 %1125
    %1127 = vrot.lane.b32.xlu0 %v62, 116
    %v1128 = vpop.permute.xlu0 %1127
    %1129 = vrot.lane.b32.xlu0 %v27, 116
    %v1130 = vpop.permute.xlu0 %1129
    %1131 = vrot.lane.b32.xlu0 %v63, 116
    %v1132 = vpop.permute.xlu0 %1131
    %1133 = vrot.lane.b32.xlu0 %v64, 116
    %v1134 = vpop.permute.xlu0 %1133
    %1135 = vrot.lane.b32.xlu0 %v65, 116
    %v1136 = vpop.permute.xlu0 %1135
    %1137 = vrot.lane.b32.xlu0 %v28, 116
    %v1138 = vpop.permute.xlu0 %1137
    %1139 = vrot.lane.b32.xlu0 %v66, 116
    %v1140 = vpop.permute.xlu0 %1139
    %1141 = vrot.lane.b32.xlu0 %v67, 116
    %v1142 = vpop.permute.xlu0 %1141
    %1143 = vrot.lane.b32.xlu0 %v68, 116
    %v1144 = vpop.permute.xlu0 %1143
    %1145 = vrot.lane.b32.xlu0 %v29, 116
    %v1146 = vpop.permute.xlu0 %1145
    %1147 = vrot.lane.b32.xlu0 %v69, 116
    %v1148 = vpop.permute.xlu0 %1147
    %1149 = vrot.lane.b32.xlu0 %v70, 116
    %v1150 = vpop.permute.xlu0 %1149
    %1151 = vrot.lane.b32.xlu0 %v71, 116
    %v1152 = vpop.permute.xlu0 %1151
    %1153 = vrot.lane.b32.xlu0 %v30, 116
    %v1154 = vpop.permute.xlu0 %1153
    %1155 = vrot.lane.b32.xlu0 %v72, 116
    %v1156 = vpop.permute.xlu0 %1155
    %1157 = vrot.lane.b32.xlu0 %v73, 116
    %v1158 = vpop.permute.xlu0 %1157
    %1159 = vrot.lane.b32.xlu0 %v74, 116
    %v1160 = vpop.permute.xlu0 %1159
    %1161 = vrot.lane.b32.xlu0 %v31, 116
    %v1162 = vpop.permute.xlu0 %1161
    %1163 = vrot.lane.b32.xlu0 %v75, 116
    %v1164 = vpop.permute.xlu0 %1163
    %1165 = vrot.lane.b32.xlu0 %v76, 116
    %v1166 = vpop.permute.xlu0 %1165
    %1167 = vrot.lane.b32.xlu0 %v77, 116
    %v1168 = vpop.permute.xlu0 %1167
    %1169 = vrot.lane.b32.xlu0 %v32, 116
    %v1170 = vpop.permute.xlu0 %1169
    %1171 = vrot.lane.b32.xlu0 %v78, 116
    %v1172 = vpop.permute.xlu0 %1171
    %1173 = vrot.lane.b32.xlu0 %v79, 116
    %v1174 = vpop.permute.xlu0 %1173
    %1175 = vrot.lane.b32.xlu0 %v80, 116
    %v1176 = vpop.permute.xlu0 %1175
    %1177 = vrot.lane.b32.xlu0 %v33, 116
    %v1178 = vpop.permute.xlu0 %1177
    %1179 = vrot.lane.b32.xlu0 %v81, 116
    %v1180 = vpop.permute.xlu0 %1179
    %1181 = vrot.lane.b32.xlu0 %v82, 116
    %v1182 = vpop.permute.xlu0 %1181
    %1183 = vrot.lane.b32.xlu0 %v83, 116
    %v1184 = vpop.permute.xlu0 %1183
    %1185 = vrot.lane.b32.xlu0 %v34, 116
    %v1186 = vpop.permute.xlu0 %1185
    %1187 = vrot.lane.b32.xlu0 %v84, 116
    %v1188 = vpop.permute.xlu0 %1187
    %1189 = vrot.lane.b32.xlu0 %v85, 116
    %v1190 = vpop.permute.xlu0 %1189
    %1191 = vrot.lane.b32.xlu0 %v86, 116
    %v1192 = vpop.permute.xlu0 %1191
    %1193 = vrot.lane.b32.xlu0 %v35, 116
    %v1194 = vpop.permute.xlu0 %1193
    %1195 = vrot.lane.b32.xlu0 %v87, 116
    %v1196 = vpop.permute.xlu0 %1195
    %1197 = vrot.lane.b32.xlu0 %v88, 116
    %v1198 = vpop.permute.xlu0 %1197
    %1199 = vrot.lane.b32.xlu0 %v89, 116
    %v1200 = vpop.permute.xlu0 %1199
    %1201 = vrot.lane.b32.xlu0 %v36, 116
    %v1202 = vpop.permute.xlu0 %1201
    %1203 = vrot.lane.b32.xlu0 %v90, 116
    %v1204 = vpop.permute.xlu0 %1203
    %1205 = vrot.lane.b32.xlu0 %v91, 116
    %v1206 = vpop.permute.xlu0 %1205
    %1207 = vrot.lane.b32.xlu0 %v92, 116
    %v1208 = vpop.permute.xlu0 %1207
    %1209 = vrot.lane.b32.xlu0 %v37, 116
    %v1210 = vpop.permute.xlu0 %1209
    %1211 = vrot.lane.b32.xlu0 %v93, 116
    %v1212 = vpop.permute.xlu0 %1211
    %1213 = vrot.lane.b32.xlu0 %v94, 116
    %v1214 = vpop.permute.xlu0 %1213
    %1215 = vrot.lane.b32.xlu0 %v95, 116
    %v1216 = vpop.permute.xlu0 %1215
    %1217 = vrot.lane.b32.xlu0 %v38, 116
    %v1218 = vpop.permute.xlu0 %1217
    %1219 = vrot.lane.b32.xlu0 %v96, 116
    %v1220 = vpop.permute.xlu0 %1219
    %1221 = vrot.lane.b32.xlu0 %v97, 116
    %v1222 = vpop.permute.xlu0 %1221
    %1223 = vrot.lane.b32.xlu0 %v98, 116
    %v1224 = vpop.permute.xlu0 %1223
    %1225 = vrot.lane.b32.xlu0 %v39, 116
    %v1226 = vpop.permute.xlu0 %1225
    %1227 = vrot.lane.b32.xlu0 %v99, 116
    %v1228 = vpop.permute.xlu0 %1227
    %1229 = vrot.lane.b32.xlu0 %v100, 116
    %v1230 = vpop.permute.xlu0 %1229
    %1231 = vrot.lane.b32.xlu0 %v101, 116
    %v1232 = vpop.permute.xlu0 %1231
    %1233 = vrot.lane.b32.xlu0 %v40, 116
    %v1234 = vpop.permute.xlu0 %1233
    %1235 = vrot.lane.b32.xlu0 %v102, 116
    %v1236 = vpop.permute.xlu0 %1235
    %1237 = vrot.lane.b32.xlu0 %v103, 116
    %v1238 = vpop.permute.xlu0 %1237
    %1239 = vrot.lane.b32.xlu0 %v104, 116
    %v1240 = vpop.permute.xlu0 %1239
    %1305 = vrot.lane.b32.xlu0 %v25, 114
    %v1306 = vpop.permute.xlu0 %1305
    %1307 = vrot.lane.b32.xlu0 %v57, 114
    %v1308 = vpop.permute.xlu0 %1307
    %1309 = vrot.lane.b32.xlu0 %v58, 114
    %v1310 = vpop.permute.xlu0 %1309
    %1311 = vrot.lane.b32.xlu0 %v59, 114
    %v1312 = vpop.permute.xlu0 %1311
    %1313 = vrot.lane.b32.xlu0 %v26, 114
    %v1314 = vpop.permute.xlu0 %1313
    %1315 = vrot.lane.b32.xlu0 %v60, 114
    %v1316 = vpop.permute.xlu0 %1315
    %1317 = vrot.lane.b32.xlu0 %v61, 114
    %v1318 = vpop.permute.xlu0 %1317
    %1319 = vrot.lane.b32.xlu0 %v62, 114
    %v1320 = vpop.permute.xlu0 %1319
    %1321 = vrot.lane.b32.xlu0 %v27, 114
    %v1322 = vpop.permute.xlu0 %1321
    %1323 = vrot.lane.b32.xlu0 %v63, 114
    %v1324 = vpop.permute.xlu0 %1323
    %1325 = vrot.lane.b32.xlu0 %v64, 114
    %v1326 = vpop.permute.xlu0 %1325
    %1327 = vrot.lane.b32.xlu0 %v65, 114
    %v1328 = vpop.permute.xlu0 %1327
    %1329 = vrot.lane.b32.xlu0 %v28, 114
    %v1330 = vpop.permute.xlu0 %1329
    %1331 = vrot.lane.b32.xlu0 %v66, 114
    %v1332 = vpop.permute.xlu0 %1331
    %1333 = vrot.lane.b32.xlu0 %v67, 114
    %v1334 = vpop.permute.xlu0 %1333
    %1335 = vrot.lane.b32.xlu0 %v68, 114
    %v1336 = vpop.permute.xlu0 %1335
    %1337 = vrot.lane.b32.xlu0 %v29, 114
    %v1338 = vpop.permute.xlu0 %1337
    %1339 = vrot.lane.b32.xlu0 %v69, 114
    %v1340 = vpop.permute.xlu0 %1339
    %1341 = vrot.lane.b32.xlu0 %v70, 114
    %v1342 = vpop.permute.xlu0 %1341
    %1343 = vrot.lane.b32.xlu0 %v71, 114
    %v1344 = vpop.permute.xlu0 %1343
    %1345 = vrot.lane.b32.xlu0 %v30, 114
    %v1346 = vpop.permute.xlu0 %1345
    %1347 = vrot.lane.b32.xlu0 %v72, 114
    %v1348 = vpop.permute.xlu0 %1347
    %1349 = vrot.lane.b32.xlu0 %v73, 114
    %v1350 = vpop.permute.xlu0 %1349
    %1351 = vrot.lane.b32.xlu0 %v74, 114
    %v1352 = vpop.permute.xlu0 %1351
    %1353 = vrot.lane.b32.xlu0 %v31, 114
    %v1354 = vpop.permute.xlu0 %1353
    %1355 = vrot.lane.b32.xlu0 %v75, 114
    %v1356 = vpop.permute.xlu0 %1355
    %1357 = vrot.lane.b32.xlu0 %v76, 114
    %v1358 = vpop.permute.xlu0 %1357
    %1359 = vrot.lane.b32.xlu0 %v77, 114
    %v1360 = vpop.permute.xlu0 %1359
    %1361 = vrot.lane.b32.xlu0 %v32, 114
    %v1362 = vpop.permute.xlu0 %1361
    %1363 = vrot.lane.b32.xlu0 %v78, 114
    %v1364 = vpop.permute.xlu0 %1363
    %1365 = vrot.lane.b32.xlu0 %v79, 114
    %v1366 = vpop.permute.xlu0 %1365
    %1367 = vrot.lane.b32.xlu0 %v80, 114
    %v1368 = vpop.permute.xlu0 %1367
    %1369 = vrot.lane.b32.xlu0 %v33, 114
    %v1370 = vpop.permute.xlu0 %1369
    %1371 = vrot.lane.b32.xlu0 %v81, 114
    %v1372 = vpop.permute.xlu0 %1371
    %1373 = vrot.lane.b32.xlu0 %v82, 114
    %v1374 = vpop.permute.xlu0 %1373
    %1375 = vrot.lane.b32.xlu0 %v83, 114
    %v1376 = vpop.permute.xlu0 %1375
    %1377 = vrot.lane.b32.xlu0 %v34, 114
    %v1378 = vpop.permute.xlu0 %1377
    %1379 = vrot.lane.b32.xlu0 %v84, 114
    %v1380 = vpop.permute.xlu0 %1379
    %1381 = vrot.lane.b32.xlu0 %v85, 114
    %v1382 = vpop.permute.xlu0 %1381
    %1383 = vrot.lane.b32.xlu0 %v86, 114
    %v1384 = vpop.permute.xlu0 %1383
    %1385 = vrot.lane.b32.xlu0 %v35, 114
    %v1386 = vpop.permute.xlu0 %1385
    %1387 = vrot.lane.b32.xlu0 %v87, 114
    %v1388 = vpop.permute.xlu0 %1387
    %1389 = vrot.lane.b32.xlu0 %v88, 114
    %v1390 = vpop.permute.xlu0 %1389
    %1391 = vrot.lane.b32.xlu0 %v89, 114
    %v1392 = vpop.permute.xlu0 %1391
    %1393 = vrot.lane.b32.xlu0 %v36, 114
    %v1394 = vpop.permute.xlu0 %1393
    %1395 = vrot.lane.b32.xlu0 %v90, 114
    %v1396 = vpop.permute.xlu0 %1395
    %1397 = vrot.lane.b32.xlu0 %v91, 114
    %v1398 = vpop.permute.xlu0 %1397
    %1399 = vrot.lane.b32.xlu0 %v92, 114
    %v1400 = vpop.permute.xlu0 %1399
    %1401 = vrot.lane.b32.xlu0 %v37, 114
    %v1402 = vpop.permute.xlu0 %1401
    %1403 = vrot.lane.b32.xlu0 %v93, 114
    %v1404 = vpop.permute.xlu0 %1403
    %1405 = vrot.lane.b32.xlu0 %v94, 114
    %v1406 = vpop.permute.xlu0 %1405
    %1407 = vrot.lane.b32.xlu0 %v95, 114
    %v1408 = vpop.permute.xlu0 %1407
    %1409 = vrot.lane.b32.xlu0 %v38, 114
    %v1410 = vpop.permute.xlu0 %1409
    %1411 = vrot.lane.b32.xlu0 %v96, 114
    %v1412 = vpop.permute.xlu0 %1411
    %1413 = vrot.lane.b32.xlu0 %v97, 114
    %v1414 = vpop.permute.xlu0 %1413
    %1415 = vrot.lane.b32.xlu0 %v98, 114
    %v1416 = vpop.permute.xlu0 %1415
    %1417 = vrot.lane.b32.xlu0 %v39, 114
    %v1418 = vpop.permute.xlu0 %1417
    %1419 = vrot.lane.b32.xlu0 %v99, 114
    %v1420 = vpop.permute.xlu0 %1419
    %1421 = vrot.lane.b32.xlu0 %v100, 114
    %v1422 = vpop.permute.xlu0 %1421
    %1423 = vrot.lane.b32.xlu0 %v101, 114
    %v1424 = vpop.permute.xlu0 %1423
    %1425 = vrot.lane.b32.xlu0 %v40, 114
    %v1426 = vpop.permute.xlu0 %1425
    %1427 = vrot.lane.b32.xlu0 %v102, 114
    %v1428 = vpop.permute.xlu0 %1427
    %1429 = vrot.lane.b32.xlu0 %v103, 114
    %v1430 = vpop.permute.xlu0 %1429
    %1431 = vrot.lane.b32.xlu0 %v104, 114
    %v1432 = vpop.permute.xlu0 %1431
    %v1497 = vrot.slane %v154, 4
    %vm1498 = vcmask 1047556
    %v1499 = vsel %vm1498, %v1497, %v25
    %v1501 = vunpack.c.l.s4 1934713408
    %v1502 = vunpack.c.0.s8 %v1501
    %v1503 = vperm.slane %v1499, %v1502
    %v1504 = vrot.slane %v538, 4
    %v1505 = vsel %vm1498, %v1504, %v346
    %v1507 = vunpack.c.l.s4 1934713408
    %v1508 = vunpack.c.0.s8 %v1507
    %v1509 = vperm.slane %v1505, %v1508
    %v1510 = vrot.slane %v922, 4
    %v1511 = vsel %vm1498, %v1510, %v730
    %v1513 = vunpack.c.l.s4 1934713408
    %v1514 = vunpack.c.0.s8 %v1513
    %v1515 = vperm.slane %v1511, %v1514
    %v1516 = vrot.slane %v1306, 4
    %v1517 = vsel %vm1498, %v1516, %v1114
    %v1519 = vunpack.c.l.s4 1934713408
    %v1520 = vunpack.c.0.s8 %v1519
    %v1521 = vperm.slane %v1517, %v1520
    %v1522 = vrot.slane %v170, 4
    %v1523 = vsel %vm1498, %v1522, %v27
    %v1525 = vunpack.c.l.s4 1934713408
    %v1526 = vunpack.c.0.s8 %v1525
    %v1527 = vperm.slane %v1523, %v1526
    %v1528 = vrot.slane %v554, 4
    %v1529 = vsel %vm1498, %v1528, %v362
    %v1531 = vunpack.c.l.s4 1934713408
    %v1532 = vunpack.c.0.s8 %v1531
    %v1533 = vperm.slane %v1529, %v1532
    %v1534 = vrot.slane %v938, 4
    %v1535 = vsel %vm1498, %v1534, %v746
    %v1537 = vunpack.c.l.s4 1934713408
    %v1538 = vunpack.c.0.s8 %v1537
    %v1539 = vperm.slane %v1535, %v1538
    %v1540 = vrot.slane %v1322, 4
    %v1541 = vsel %vm1498, %v1540, %v1130
    %v1543 = vunpack.c.l.s4 1934713408
    %v1544 = vunpack.c.0.s8 %v1543
    %v1545 = vperm.slane %v1541, %v1544
    %v1546 = vrot.slane %v186, 4
    %v1547 = vsel %vm1498, %v1546, %v29
    %v1549 = vunpack.c.l.s4 1934713408
    %v1550 = vunpack.c.0.s8 %v1549
    %v1551 = vperm.slane %v1547, %v1550
    %v1552 = vrot.slane %v570, 4
    %v1553 = vsel %vm1498, %v1552, %v378
    %v1555 = vunpack.c.l.s4 1934713408
    %v1556 = vunpack.c.0.s8 %v1555
    %v1557 = vperm.slane %v1553, %v1556
    %v1558 = vrot.slane %v954, 4
    %v1559 = vsel %vm1498, %v1558, %v762
    %v1561 = vunpack.c.l.s4 1934713408
    %v1562 = vunpack.c.0.s8 %v1561
    %v1563 = vperm.slane %v1559, %v1562
    %v1564 = vrot.slane %v1338, 4
    %v1565 = vsel %vm1498, %v1564, %v1146
    %v1567 = vunpack.c.l.s4 1934713408
    %v1568 = vunpack.c.0.s8 %v1567
    %v1569 = vperm.slane %v1565, %v1568
    %v1570 = vrot.slane %v202, 4
    %v1571 = vsel %vm1498, %v1570, %v31
    %v1573 = vunpack.c.l.s4 1934713408
    %v1574 = vunpack.c.0.s8 %v1573
    %v1575 = vperm.slane %v1571, %v1574
    %v1576 = vrot.slane %v586, 4
    %v1577 = vsel %vm1498, %v1576, %v394
    %v1579 = vunpack.c.l.s4 1934713408
    %v1580 = vunpack.c.0.s8 %v1579
    %v1581 = vperm.slane %v1577, %v1580
    %v1582 = vrot.slane %v970, 4
    %v1583 = vsel %vm1498, %v1582, %v778
    %v1585 = vunpack.c.l.s4 1934713408
    %v1586 = vunpack.c.0.s8 %v1585
    %v1587 = vperm.slane %v1583, %v1586
    %v1588 = vrot.slane %v1354, 4
    %v1589 = vsel %vm1498, %v1588, %v1162
    %v1591 = vunpack.c.l.s4 1934713408
    %v1592 = vunpack.c.0.s8 %v1591
    %v1593 = vperm.slane %v1589, %v1592
    %v1594 = vrot.slane %v218, 4
    %v1595 = vsel %vm1498, %v1594, %v33
    %v1597 = vunpack.c.l.s4 1934713408
    %v1598 = vunpack.c.0.s8 %v1597
    %v1599 = vperm.slane %v1595, %v1598
    %v1600 = vrot.slane %v602, 4
    %v1601 = vsel %vm1498, %v1600, %v410
    %v1603 = vunpack.c.l.s4 1934713408
    %v1604 = vunpack.c.0.s8 %v1603
    %v1605 = vperm.slane %v1601, %v1604
    %v1606 = vrot.slane %v986, 4
    %v1607 = vsel %vm1498, %v1606, %v794
    %v1609 = vunpack.c.l.s4 1934713408
    %v1610 = vunpack.c.0.s8 %v1609
    %v1611 = vperm.slane %v1607, %v1610
    %v1612 = vrot.slane %v1370, 4
    %v1613 = vsel %vm1498, %v1612, %v1178
    %v1615 = vunpack.c.l.s4 1934713408
    %v1616 = vunpack.c.0.s8 %v1615
    %v1617 = vperm.slane %v1613, %v1616
    %v1618 = vrot.slane %v234, 4
    %v1619 = vsel %vm1498, %v1618, %v35
    %v1621 = vunpack.c.l.s4 1934713408
    %v1622 = vunpack.c.0.s8 %v1621
    %v1623 = vperm.slane %v1619, %v1622
    %v1624 = vrot.slane %v618, 4
    %v1625 = vsel %vm1498, %v1624, %v426
    %v1627 = vunpack.c.l.s4 1934713408
    %v1628 = vunpack.c.0.s8 %v1627
    %v1629 = vperm.slane %v1625, %v1628
    %v1630 = vrot.slane %v1002, 4
    %v1631 = vsel %vm1498, %v1630, %v810
    %v1633 = vunpack.c.l.s4 1934713408
    %v1634 = vunpack.c.0.s8 %v1633
    %v1635 = vperm.slane %v1631, %v1634
    %v1636 = vrot.slane %v1386, 4
    %v1637 = vsel %vm1498, %v1636, %v1194
    %v1639 = vunpack.c.l.s4 1934713408
    %v1640 = vunpack.c.0.s8 %v1639
    %v1641 = vperm.slane %v1637, %v1640
    %v1642 = vrot.slane %v250, 4
    %v1643 = vsel %vm1498, %v1642, %v37
    %v1645 = vunpack.c.l.s4 1934713408
    %v1646 = vunpack.c.0.s8 %v1645
    %v1647 = vperm.slane %v1643, %v1646
    %v1648 = vrot.slane %v634, 4
    %v1649 = vsel %vm1498, %v1648, %v442
    %v1651 = vunpack.c.l.s4 1934713408
    %v1652 = vunpack.c.0.s8 %v1651
    %v1653 = vperm.slane %v1649, %v1652
    %v1654 = vrot.slane %v1018, 4
    %v1655 = vsel %vm1498, %v1654, %v826
    %v1657 = vunpack.c.l.s4 1934713408
    %v1658 = vunpack.c.0.s8 %v1657
    %v1659 = vperm.slane %v1655, %v1658
    %v1660 = vrot.slane %v1402, 4
    %v1661 = vsel %vm1498, %v1660, %v1210
    %v1663 = vunpack.c.l.s4 1934713408
    %v1664 = vunpack.c.0.s8 %v1663
    %v1665 = vperm.slane %v1661, %v1664
    %v1666 = vrot.slane %v266, 4
    %v1667 = vsel %vm1498, %v1666, %v39
    %v1669 = vunpack.c.l.s4 1934713408
    %v1670 = vunpack.c.0.s8 %v1669
    %v1671 = vperm.slane %v1667, %v1670
    %v1672 = vrot.slane %v650, 4
    %v1673 = vsel %vm1498, %v1672, %v458
    %v1675 = vunpack.c.l.s4 1934713408
    %v1676 = vunpack.c.0.s8 %v1675
    %v1677 = vperm.slane %v1673, %v1676
    %v1678 = vrot.slane %v1034, 4
    %v1679 = vsel %vm1498, %v1678, %v842
    %v1681 = vunpack.c.l.s4 1934713408
    %v1682 = vunpack.c.0.s8 %v1681
    %v1683 = vperm.slane %v1679, %v1682
    %v1684 = vrot.slane %v1418, 4
    %v1685 = vsel %vm1498, %v1684, %v1226
    %v1687 = vunpack.c.l.s4 1934713408
    %v1688 = vunpack.c.0.s8 %v1687
    %v1689 = vperm.slane %v1685, %v1688
    %v1690 = vrot.slane %v156, 4
    %v1691 = vsel %vm1498, %v1690, %v57
    %v1693 = vunpack.c.l.s4 1934713408
    %v1694 = vunpack.c.0.s8 %v1693
    %v1695 = vperm.slane %v1691, %v1694
    %v1696 = vrot.slane %v540, 4
    %v1697 = vsel %vm1498, %v1696, %v348
    %v1699 = vunpack.c.l.s4 1934713408
    %v1700 = vunpack.c.0.s8 %v1699
    %v1701 = vperm.slane %v1697, %v1700
    %v1702 = vrot.slane %v924, 4
    %v1703 = vsel %vm1498, %v1702, %v732
    %v1705 = vunpack.c.l.s4 1934713408
    %v1706 = vunpack.c.0.s8 %v1705
    %v1707 = vperm.slane %v1703, %v1706
    %v1708 = vrot.slane %v1308, 4
    %v1709 = vsel %vm1498, %v1708, %v1116
    %v1711 = vunpack.c.l.s4 1934713408
    %v1712 = vunpack.c.0.s8 %v1711
    %v1713 = vperm.slane %v1709, %v1712
    %v1714 = vrot.slane %v172, 4
    %v1715 = vsel %vm1498, %v1714, %v63
    %v1717 = vunpack.c.l.s4 1934713408
    %v1718 = vunpack.c.0.s8 %v1717
    %v1719 = vperm.slane %v1715, %v1718
    %v1720 = vrot.slane %v556, 4
    %v1721 = vsel %vm1498, %v1720, %v364
    %v1723 = vunpack.c.l.s4 1934713408
    %v1724 = vunpack.c.0.s8 %v1723
    %v1725 = vperm.slane %v1721, %v1724
    %v1726 = vrot.slane %v940, 4
    %v1727 = vsel %vm1498, %v1726, %v748
    %v1729 = vunpack.c.l.s4 1934713408
    %v1730 = vunpack.c.0.s8 %v1729
    %v1731 = vperm.slane %v1727, %v1730
    %v1732 = vrot.slane %v1324, 4
    %v1733 = vsel %vm1498, %v1732, %v1132
    %v1735 = vunpack.c.l.s4 1934713408
    %v1736 = vunpack.c.0.s8 %v1735
    %v1737 = vperm.slane %v1733, %v1736
    %v1738 = vrot.slane %v188, 4
    %v1739 = vsel %vm1498, %v1738, %v69
    %v1741 = vunpack.c.l.s4 1934713408
    %v1742 = vunpack.c.0.s8 %v1741
    %v1743 = vperm.slane %v1739, %v1742
    %v1744 = vrot.slane %v572, 4
    %v1745 = vsel %vm1498, %v1744, %v380
    %v1747 = vunpack.c.l.s4 1934713408
    %v1748 = vunpack.c.0.s8 %v1747
    %v1749 = vperm.slane %v1745, %v1748
    %v1750 = vrot.slane %v956, 4
    %v1751 = vsel %vm1498, %v1750, %v764
    %v1753 = vunpack.c.l.s4 1934713408
    %v1754 = vunpack.c.0.s8 %v1753
    %v1755 = vperm.slane %v1751, %v1754
    %v1756 = vrot.slane %v1340, 4
    %v1757 = vsel %vm1498, %v1756, %v1148
    %v1759 = vunpack.c.l.s4 1934713408
    %v1760 = vunpack.c.0.s8 %v1759
    %v1761 = vperm.slane %v1757, %v1760
    %v1762 = vrot.slane %v204, 4
    %v1763 = vsel %vm1498, %v1762, %v75
    %v1765 = vunpack.c.l.s4 1934713408
    %v1766 = vunpack.c.0.s8 %v1765
    %v1767 = vperm.slane %v1763, %v1766
    %v1768 = vrot.slane %v588, 4
    %v1769 = vsel %vm1498, %v1768, %v396
    %v1771 = vunpack.c.l.s4 1934713408
    %v1772 = vunpack.c.0.s8 %v1771
    %v1773 = vperm.slane %v1769, %v1772
    %v1774 = vrot.slane %v972, 4
    %v1775 = vsel %vm1498, %v1774, %v780
    %v1777 = vunpack.c.l.s4 1934713408
    %v1778 = vunpack.c.0.s8 %v1777
    %v1779 = vperm.slane %v1775, %v1778
    %v1780 = vrot.slane %v1356, 4
    %v1781 = vsel %vm1498, %v1780, %v1164
    %v1783 = vunpack.c.l.s4 1934713408
    %v1784 = vunpack.c.0.s8 %v1783
    %v1785 = vperm.slane %v1781, %v1784
    %v1786 = vrot.slane %v220, 4
    %v1787 = vsel %vm1498, %v1786, %v81
    %v1789 = vunpack.c.l.s4 1934713408
    %v1790 = vunpack.c.0.s8 %v1789
    %v1791 = vperm.slane %v1787, %v1790
    %v1792 = vrot.slane %v604, 4
    %v1793 = vsel %vm1498, %v1792, %v412
    %v1795 = vunpack.c.l.s4 1934713408
    %v1796 = vunpack.c.0.s8 %v1795
    %v1797 = vperm.slane %v1793, %v1796
    %v1798 = vrot.slane %v988, 4
    %v1799 = vsel %vm1498, %v1798, %v796
    %v1801 = vunpack.c.l.s4 1934713408
    %v1802 = vunpack.c.0.s8 %v1801
    %v1803 = vperm.slane %v1799, %v1802
    %v1804 = vrot.slane %v1372, 4
    %v1805 = vsel %vm1498, %v1804, %v1180
    %v1807 = vunpack.c.l.s4 1934713408
    %v1808 = vunpack.c.0.s8 %v1807
    %v1809 = vperm.slane %v1805, %v1808
    %v1810 = vrot.slane %v236, 4
    %v1811 = vsel %vm1498, %v1810, %v87
    %v1813 = vunpack.c.l.s4 1934713408
    %v1814 = vunpack.c.0.s8 %v1813
    %v1815 = vperm.slane %v1811, %v1814
    %v1816 = vrot.slane %v620, 4
    %v1817 = vsel %vm1498, %v1816, %v428
    %v1819 = vunpack.c.l.s4 1934713408
    %v1820 = vunpack.c.0.s8 %v1819
    %v1821 = vperm.slane %v1817, %v1820
    %v1822 = vrot.slane %v1004, 4
    %v1823 = vsel %vm1498, %v1822, %v812
    %v1825 = vunpack.c.l.s4 1934713408
    %v1826 = vunpack.c.0.s8 %v1825
    %v1827 = vperm.slane %v1823, %v1826
    %v1828 = vrot.slane %v1388, 4
    %v1829 = vsel %vm1498, %v1828, %v1196
    %v1831 = vunpack.c.l.s4 1934713408
    %v1832 = vunpack.c.0.s8 %v1831
    %v1833 = vperm.slane %v1829, %v1832
    %v1834 = vrot.slane %v252, 4
    %v1835 = vsel %vm1498, %v1834, %v93
    %v1837 = vunpack.c.l.s4 1934713408
    %v1838 = vunpack.c.0.s8 %v1837
    %v1839 = vperm.slane %v1835, %v1838
    %v1840 = vrot.slane %v636, 4
    %v1841 = vsel %vm1498, %v1840, %v444
    %v1843 = vunpack.c.l.s4 1934713408
    %v1844 = vunpack.c.0.s8 %v1843
    %v1845 = vperm.slane %v1841, %v1844
    %v1846 = vrot.slane %v1020, 4
    %v1847 = vsel %vm1498, %v1846, %v828
    %v1849 = vunpack.c.l.s4 1934713408
    %v1850 = vunpack.c.0.s8 %v1849
    %v1851 = vperm.slane %v1847, %v1850
    %v1852 = vrot.slane %v1404, 4
    %v1853 = vsel %vm1498, %v1852, %v1212
    %v1855 = vunpack.c.l.s4 1934713408
    %v1856 = vunpack.c.0.s8 %v1855
    %v1857 = vperm.slane %v1853, %v1856
    %v1858 = vrot.slane %v268, 4
    %v1859 = vsel %vm1498, %v1858, %v99
    %v1861 = vunpack.c.l.s4 1934713408
    %v1862 = vunpack.c.0.s8 %v1861
    %v1863 = vperm.slane %v1859, %v1862
    %v1864 = vrot.slane %v652, 4
    %v1865 = vsel %vm1498, %v1864, %v460
    %v1867 = vunpack.c.l.s4 1934713408
    %v1868 = vunpack.c.0.s8 %v1867
    %v1869 = vperm.slane %v1865, %v1868
    %v1870 = vrot.slane %v1036, 4
    %v1871 = vsel %vm1498, %v1870, %v844
    %v1873 = vunpack.c.l.s4 1934713408
    %v1874 = vunpack.c.0.s8 %v1873
    %v1875 = vperm.slane %v1871, %v1874
    %v1876 = vrot.slane %v1420, 4
    %v1877 = vsel %vm1498, %v1876, %v1228
    %v1879 = vunpack.c.l.s4 1934713408
    %v1880 = vunpack.c.0.s8 %v1879
    %v1881 = vperm.slane %v1877, %v1880
    %v1882 = vrot.slane %v158, 4
    %v1883 = vsel %vm1498, %v1882, %v58
    %v1885 = vunpack.c.l.s4 1934713408
    %v1886 = vunpack.c.0.s8 %v1885
    %v1887 = vperm.slane %v1883, %v1886
    %v1888 = vrot.slane %v542, 4
    %v1889 = vsel %vm1498, %v1888, %v350
    %v1891 = vunpack.c.l.s4 1934713408
    %v1892 = vunpack.c.0.s8 %v1891
    %v1893 = vperm.slane %v1889, %v1892
    %v1894 = vrot.slane %v926, 4
    %v1895 = vsel %vm1498, %v1894, %v734
    %v1897 = vunpack.c.l.s4 1934713408
    %v1898 = vunpack.c.0.s8 %v1897
    %v1899 = vperm.slane %v1895, %v1898
    %v1900 = vrot.slane %v1310, 4
    %v1901 = vsel %vm1498, %v1900, %v1118
    %v1903 = vunpack.c.l.s4 1934713408
    %v1904 = vunpack.c.0.s8 %v1903
    %v1905 = vperm.slane %v1901, %v1904
    %v1906 = vrot.slane %v174, 4
    %v1907 = vsel %vm1498, %v1906, %v64
    %v1909 = vunpack.c.l.s4 1934713408
    %v1910 = vunpack.c.0.s8 %v1909
    %v1911 = vperm.slane %v1907, %v1910
    %v1912 = vrot.slane %v558, 4
    %v1913 = vsel %vm1498, %v1912, %v366
    %v1915 = vunpack.c.l.s4 1934713408
    %v1916 = vunpack.c.0.s8 %v1915
    %v1917 = vperm.slane %v1913, %v1916
    %v1918 = vrot.slane %v942, 4
    %v1919 = vsel %vm1498, %v1918, %v750
    %v1921 = vunpack.c.l.s4 1934713408
    %v1922 = vunpack.c.0.s8 %v1921
    %v1923 = vperm.slane %v1919, %v1922
    %v1924 = vrot.slane %v1326, 4
    %v1925 = vsel %vm1498, %v1924, %v1134
    %v1927 = vunpack.c.l.s4 1934713408
    %v1928 = vunpack.c.0.s8 %v1927
    %v1929 = vperm.slane %v1925, %v1928
    %v1930 = vrot.slane %v190, 4
    %v1931 = vsel %vm1498, %v1930, %v70
    %v1933 = vunpack.c.l.s4 1934713408
    %v1934 = vunpack.c.0.s8 %v1933
    %v1935 = vperm.slane %v1931, %v1934
    %v1936 = vrot.slane %v574, 4
    %v1937 = vsel %vm1498, %v1936, %v382
    %v1939 = vunpack.c.l.s4 1934713408
    %v1940 = vunpack.c.0.s8 %v1939
    %v1941 = vperm.slane %v1937, %v1940
    %v1942 = vrot.slane %v958, 4
    %v1943 = vsel %vm1498, %v1942, %v766
    %v1945 = vunpack.c.l.s4 1934713408
    %v1946 = vunpack.c.0.s8 %v1945
    %v1947 = vperm.slane %v1943, %v1946
    %v1948 = vrot.slane %v1342, 4
    %v1949 = vsel %vm1498, %v1948, %v1150
    %v1951 = vunpack.c.l.s4 1934713408
    %v1952 = vunpack.c.0.s8 %v1951
    %v1953 = vperm.slane %v1949, %v1952
    %v1954 = vrot.slane %v206, 4
    %v1955 = vsel %vm1498, %v1954, %v76
    %v1957 = vunpack.c.l.s4 1934713408
    %v1958 = vunpack.c.0.s8 %v1957
    %v1959 = vperm.slane %v1955, %v1958
    %v1960 = vrot.slane %v590, 4
    %v1961 = vsel %vm1498, %v1960, %v398
    %v1963 = vunpack.c.l.s4 1934713408
    %v1964 = vunpack.c.0.s8 %v1963
    %v1965 = vperm.slane %v1961, %v1964
    %v1966 = vrot.slane %v974, 4
    %v1967 = vsel %vm1498, %v1966, %v782
    %v1969 = vunpack.c.l.s4 1934713408
    %v1970 = vunpack.c.0.s8 %v1969
    %v1971 = vperm.slane %v1967, %v1970
    %v1972 = vrot.slane %v1358, 4
    %v1973 = vsel %vm1498, %v1972, %v1166
    %v1975 = vunpack.c.l.s4 1934713408
    %v1976 = vunpack.c.0.s8 %v1975
    %v1977 = vperm.slane %v1973, %v1976
    %v1978 = vrot.slane %v222, 4
    %v1979 = vsel %vm1498, %v1978, %v82
    %v1981 = vunpack.c.l.s4 1934713408
    %v1982 = vunpack.c.0.s8 %v1981
    %v1983 = vperm.slane %v1979, %v1982
    %v1984 = vrot.slane %v606, 4
    %v1985 = vsel %vm1498, %v1984, %v414
    %v1987 = vunpack.c.l.s4 1934713408
    %v1988 = vunpack.c.0.s8 %v1987
    %v1989 = vperm.slane %v1985, %v1988
    %v1990 = vrot.slane %v990, 4
    %v1991 = vsel %vm1498, %v1990, %v798
    %v1993 = vunpack.c.l.s4 1934713408
    %v1994 = vunpack.c.0.s8 %v1993
    %v1995 = vperm.slane %v1991, %v1994
    %v1996 = vrot.slane %v1374, 4
    %v1997 = vsel %vm1498, %v1996, %v1182
    %v1999 = vunpack.c.l.s4 1934713408
    %v2000 = vunpack.c.0.s8 %v1999
    %v2001 = vperm.slane %v1997, %v2000
    %v2002 = vrot.slane %v238, 4
    %v2003 = vsel %vm1498, %v2002, %v88
    %v2005 = vunpack.c.l.s4 1934713408
    %v2006 = vunpack.c.0.s8 %v2005
    %v2007 = vperm.slane %v2003, %v2006
    %v2008 = vrot.slane %v622, 4
    %v2009 = vsel %vm1498, %v2008, %v430
    %v2011 = vunpack.c.l.s4 1934713408
    %v2012 = vunpack.c.0.s8 %v2011
    %v2013 = vperm.slane %v2009, %v2012
    %v2014 = vrot.slane %v1006, 4
    %v2015 = vsel %vm1498, %v2014, %v814
    %v2017 = vunpack.c.l.s4 1934713408
    %v2018 = vunpack.c.0.s8 %v2017
    %v2019 = vperm.slane %v2015, %v2018
    %v2020 = vrot.slane %v1390, 4
    %v2021 = vsel %vm1498, %v2020, %v1198
    %v2023 = vunpack.c.l.s4 1934713408
    %v2024 = vunpack.c.0.s8 %v2023
    %v2025 = vperm.slane %v2021, %v2024
    %v2026 = vrot.slane %v254, 4
    %v2027 = vsel %vm1498, %v2026, %v94
    %v2029 = vunpack.c.l.s4 1934713408
    %v2030 = vunpack.c.0.s8 %v2029
    %v2031 = vperm.slane %v2027, %v2030
    %v2032 = vrot.slane %v638, 4
    %v2033 = vsel %vm1498, %v2032, %v446
    %v2035 = vunpack.c.l.s4 1934713408
    %v2036 = vunpack.c.0.s8 %v2035
    %v2037 = vperm.slane %v2033, %v2036
    %v2038 = vrot.slane %v1022, 4
    %v2039 = vsel %vm1498, %v2038, %v830
    %v2041 = vunpack.c.l.s4 1934713408
    %v2042 = vunpack.c.0.s8 %v2041
    %v2043 = vperm.slane %v2039, %v2042
    %v2044 = vrot.slane %v1406, 4
    %v2045 = vsel %vm1498, %v2044, %v1214
    %v2047 = vunpack.c.l.s4 1934713408
    %v2048 = vunpack.c.0.s8 %v2047
    %v2049 = vperm.slane %v2045, %v2048
    %v2050 = vrot.slane %v270, 4
    %v2051 = vsel %vm1498, %v2050, %v100
    %v2053 = vunpack.c.l.s4 1934713408
    %v2054 = vunpack.c.0.s8 %v2053
    %v2055 = vperm.slane %v2051, %v2054
    %v2056 = vrot.slane %v654, 4
    %v2057 = vsel %vm1498, %v2056, %v462
    %v2059 = vunpack.c.l.s4 1934713408
    %v2060 = vunpack.c.0.s8 %v2059
    %v2061 = vperm.slane %v2057, %v2060
    %v2062 = vrot.slane %v1038, 4
    %v2063 = vsel %vm1498, %v2062, %v846
    %v2065 = vunpack.c.l.s4 1934713408
    %v2066 = vunpack.c.0.s8 %v2065
    %v2067 = vperm.slane %v2063, %v2066
    %v2068 = vrot.slane %v1422, 4
    %v2069 = vsel %vm1498, %v2068, %v1230
    %v2071 = vunpack.c.l.s4 1934713408
    %v2072 = vunpack.c.0.s8 %v2071
    %v2073 = vperm.slane %v2069, %v2072
    %v2074 = vrot.slane %v160, 4
    %v2075 = vsel %vm1498, %v2074, %v59
    %v2077 = vunpack.c.l.s4 1934713408
    %v2078 = vunpack.c.0.s8 %v2077
    %v2079 = vperm.slane %v2075, %v2078
    %v2080 = vrot.slane %v544, 4
    %v2081 = vsel %vm1498, %v2080, %v352
    %v2083 = vunpack.c.l.s4 1934713408
    %v2084 = vunpack.c.0.s8 %v2083
    %v2085 = vperm.slane %v2081, %v2084
    %v2086 = vrot.slane %v928, 4
    %v2087 = vsel %vm1498, %v2086, %v736
    %v2089 = vunpack.c.l.s4 1934713408
    %v2090 = vunpack.c.0.s8 %v2089
    %v2091 = vperm.slane %v2087, %v2090
    %v2092 = vrot.slane %v1312, 4
    %v2093 = vsel %vm1498, %v2092, %v1120
    %v2095 = vunpack.c.l.s4 1934713408
    %v2096 = vunpack.c.0.s8 %v2095
    %v2097 = vperm.slane %v2093, %v2096
    %v2098 = vrot.slane %v176, 4
    %v2099 = vsel %vm1498, %v2098, %v65
    %v2101 = vunpack.c.l.s4 1934713408
    %v2102 = vunpack.c.0.s8 %v2101
    %v2103 = vperm.slane %v2099, %v2102
    %v2104 = vrot.slane %v560, 4
    %v2105 = vsel %vm1498, %v2104, %v368
    %v2107 = vunpack.c.l.s4 1934713408
    %v2108 = vunpack.c.0.s8 %v2107
    %v2109 = vperm.slane %v2105, %v2108
    %v2110 = vrot.slane %v944, 4
    %v2111 = vsel %vm1498, %v2110, %v752
    %v2113 = vunpack.c.l.s4 1934713408
    %v2114 = vunpack.c.0.s8 %v2113
    %v2115 = vperm.slane %v2111, %v2114
    %v2116 = vrot.slane %v1328, 4
    %v2117 = vsel %vm1498, %v2116, %v1136
    %v2119 = vunpack.c.l.s4 1934713408
    %v2120 = vunpack.c.0.s8 %v2119
    %v2121 = vperm.slane %v2117, %v2120
    %v2122 = vrot.slane %v192, 4
    %v2123 = vsel %vm1498, %v2122, %v71
    %v2125 = vunpack.c.l.s4 1934713408
    %v2126 = vunpack.c.0.s8 %v2125
    %v2127 = vperm.slane %v2123, %v2126
    %v2128 = vrot.slane %v576, 4
    %v2129 = vsel %vm1498, %v2128, %v384
    %v2131 = vunpack.c.l.s4 1934713408
    %v2132 = vunpack.c.0.s8 %v2131
    %v2133 = vperm.slane %v2129, %v2132
    %v2134 = vrot.slane %v960, 4
    %v2135 = vsel %vm1498, %v2134, %v768
    %v2137 = vunpack.c.l.s4 1934713408
    %v2138 = vunpack.c.0.s8 %v2137
    %v2139 = vperm.slane %v2135, %v2138
    %v2140 = vrot.slane %v1344, 4
    %v2141 = vsel %vm1498, %v2140, %v1152
    %v2143 = vunpack.c.l.s4 1934713408
    %v2144 = vunpack.c.0.s8 %v2143
    %v2145 = vperm.slane %v2141, %v2144
    %v2146 = vrot.slane %v208, 4
    %v2147 = vsel %vm1498, %v2146, %v77
    %v2149 = vunpack.c.l.s4 1934713408
    %v2150 = vunpack.c.0.s8 %v2149
    %v2151 = vperm.slane %v2147, %v2150
    %v2152 = vrot.slane %v592, 4
    %v2153 = vsel %vm1498, %v2152, %v400
    %v2155 = vunpack.c.l.s4 1934713408
    %v2156 = vunpack.c.0.s8 %v2155
    %v2157 = vperm.slane %v2153, %v2156
    %v2158 = vrot.slane %v976, 4
    %v2159 = vsel %vm1498, %v2158, %v784
    %v2161 = vunpack.c.l.s4 1934713408
    %v2162 = vunpack.c.0.s8 %v2161
    %v2163 = vperm.slane %v2159, %v2162
    %v2164 = vrot.slane %v1360, 4
    %v2165 = vsel %vm1498, %v2164, %v1168
    %v2167 = vunpack.c.l.s4 1934713408
    %v2168 = vunpack.c.0.s8 %v2167
    %v2169 = vperm.slane %v2165, %v2168
    %v2170 = vrot.slane %v224, 4
    %v2171 = vsel %vm1498, %v2170, %v83
    %v2173 = vunpack.c.l.s4 1934713408
    %v2174 = vunpack.c.0.s8 %v2173
    %v2175 = vperm.slane %v2171, %v2174
    %v2176 = vrot.slane %v608, 4
    %v2177 = vsel %vm1498, %v2176, %v416
    %v2179 = vunpack.c.l.s4 1934713408
    %v2180 = vunpack.c.0.s8 %v2179
    %v2181 = vperm.slane %v2177, %v2180
    %v2182 = vrot.slane %v992, 4
    %v2183 = vsel %vm1498, %v2182, %v800
    %v2185 = vunpack.c.l.s4 1934713408
    %v2186 = vunpack.c.0.s8 %v2185
    %v2187 = vperm.slane %v2183, %v2186
    %v2188 = vrot.slane %v1376, 4
    %v2189 = vsel %vm1498, %v2188, %v1184
    %v2191 = vunpack.c.l.s4 1934713408
    %v2192 = vunpack.c.0.s8 %v2191
    %v2193 = vperm.slane %v2189, %v2192
    %v2194 = vrot.slane %v240, 4
    %v2195 = vsel %vm1498, %v2194, %v89
    %v2197 = vunpack.c.l.s4 1934713408
    %v2198 = vunpack.c.0.s8 %v2197
    %v2199 = vperm.slane %v2195, %v2198
    %v2200 = vrot.slane %v624, 4
    %v2201 = vsel %vm1498, %v2200, %v432
    %v2203 = vunpack.c.l.s4 1934713408
    %v2204 = vunpack.c.0.s8 %v2203
    %v2205 = vperm.slane %v2201, %v2204
    %v2206 = vrot.slane %v1008, 4
    %v2207 = vsel %vm1498, %v2206, %v816
    %v2209 = vunpack.c.l.s4 1934713408
    %v2210 = vunpack.c.0.s8 %v2209
    %v2211 = vperm.slane %v2207, %v2210
    %v2212 = vrot.slane %v1392, 4
    %v2213 = vsel %vm1498, %v2212, %v1200
    %v2215 = vunpack.c.l.s4 1934713408
    %v2216 = vunpack.c.0.s8 %v2215
    %v2217 = vperm.slane %v2213, %v2216
    %v2218 = vrot.slane %v256, 4
    %v2219 = vsel %vm1498, %v2218, %v95
    %v2221 = vunpack.c.l.s4 1934713408
    %v2222 = vunpack.c.0.s8 %v2221
    %v2223 = vperm.slane %v2219, %v2222
    %v2224 = vrot.slane %v640, 4
    %v2225 = vsel %vm1498, %v2224, %v448
    %v2227 = vunpack.c.l.s4 1934713408
    %v2228 = vunpack.c.0.s8 %v2227
    %v2229 = vperm.slane %v2225, %v2228
    %v2230 = vrot.slane %v1024, 4
    %v2231 = vsel %vm1498, %v2230, %v832
    %v2233 = vunpack.c.l.s4 1934713408
    %v2234 = vunpack.c.0.s8 %v2233
    %v2235 = vperm.slane %v2231, %v2234
    %v2236 = vrot.slane %v1408, 4
    %v2237 = vsel %vm1498, %v2236, %v1216
    %v2239 = vunpack.c.l.s4 1934713408
    %v2240 = vunpack.c.0.s8 %v2239
    %v2241 = vperm.slane %v2237, %v2240
    %v2242 = vrot.slane %v272, 4
    %v2243 = vsel %vm1498, %v2242, %v101
    %v2245 = vunpack.c.l.s4 1934713408
    %v2246 = vunpack.c.0.s8 %v2245
    %v2247 = vperm.slane %v2243, %v2246
    %v2248 = vrot.slane %v656, 4
    %v2249 = vsel %vm1498, %v2248, %v464
    %v2251 = vunpack.c.l.s4 1934713408
    %v2252 = vunpack.c.0.s8 %v2251
    %v2253 = vperm.slane %v2249, %v2252
    %v2254 = vrot.slane %v1040, 4
    %v2255 = vsel %vm1498, %v2254, %v848
    %v2257 = vunpack.c.l.s4 1934713408
    %v2258 = vunpack.c.0.s8 %v2257
    %v2259 = vperm.slane %v2255, %v2258
    %v2260 = vrot.slane %v1424, 4
    %v2261 = vsel %vm1498, %v2260, %v1232
    %v2263 = vunpack.c.l.s4 1934713408
    %v2264 = vunpack.c.0.s8 %v2263
    %v2265 = vperm.slane %v2261, %v2264
    %v2266 = vrot.slane %v162, 4
    %v2267 = vsel %vm1498, %v2266, %v26
    %v2269 = vunpack.c.l.s4 1934713408
    %v2270 = vunpack.c.0.s8 %v2269
    %v2271 = vperm.slane %v2267, %v2270
    %v2272 = vrot.slane %v546, 4
    %v2273 = vsel %vm1498, %v2272, %v354
    %v2275 = vunpack.c.l.s4 1934713408
    %v2276 = vunpack.c.0.s8 %v2275
    %v2277 = vperm.slane %v2273, %v2276
    %v2278 = vrot.slane %v930, 4
    %v2279 = vsel %vm1498, %v2278, %v738
    %v2281 = vunpack.c.l.s4 1934713408
    %v2282 = vunpack.c.0.s8 %v2281
    %v2283 = vperm.slane %v2279, %v2282
    %v2284 = vrot.slane %v1314, 4
    %v2285 = vsel %vm1498, %v2284, %v1122
    %v2287 = vunpack.c.l.s4 1934713408
    %v2288 = vunpack.c.0.s8 %v2287
    %v2289 = vperm.slane %v2285, %v2288
    %v2290 = vrot.slane %v178, 4
    %v2291 = vsel %vm1498, %v2290, %v28
    %v2293 = vunpack.c.l.s4 1934713408
    %v2294 = vunpack.c.0.s8 %v2293
    %v2295 = vperm.slane %v2291, %v2294
    %v2296 = vrot.slane %v562, 4
    %v2297 = vsel %vm1498, %v2296, %v370
    %v2299 = vunpack.c.l.s4 1934713408
    %v2300 = vunpack.c.0.s8 %v2299
    %v2301 = vperm.slane %v2297, %v2300
    %v2302 = vrot.slane %v946, 4
    %v2303 = vsel %vm1498, %v2302, %v754
    %v2305 = vunpack.c.l.s4 1934713408
    %v2306 = vunpack.c.0.s8 %v2305
    %v2307 = vperm.slane %v2303, %v2306
    %v2308 = vrot.slane %v1330, 4
    %v2309 = vsel %vm1498, %v2308, %v1138
    %v2311 = vunpack.c.l.s4 1934713408
    %v2312 = vunpack.c.0.s8 %v2311
    %v2313 = vperm.slane %v2309, %v2312
    %v2314 = vrot.slane %v194, 4
    %v2315 = vsel %vm1498, %v2314, %v30
    %v2317 = vunpack.c.l.s4 1934713408
    %v2318 = vunpack.c.0.s8 %v2317
    %v2319 = vperm.slane %v2315, %v2318
    %v2320 = vrot.slane %v578, 4
    %v2321 = vsel %vm1498, %v2320, %v386
    %v2323 = vunpack.c.l.s4 1934713408
    %v2324 = vunpack.c.0.s8 %v2323
    %v2325 = vperm.slane %v2321, %v2324
    %v2326 = vrot.slane %v962, 4
    %v2327 = vsel %vm1498, %v2326, %v770
    %v2329 = vunpack.c.l.s4 1934713408
    %v2330 = vunpack.c.0.s8 %v2329
    %v2331 = vperm.slane %v2327, %v2330
    %v2332 = vrot.slane %v1346, 4
    %v2333 = vsel %vm1498, %v2332, %v1154
    %v2335 = vunpack.c.l.s4 1934713408
    %v2336 = vunpack.c.0.s8 %v2335
    %v2337 = vperm.slane %v2333, %v2336
    %v2338 = vrot.slane %v210, 4
    %v2339 = vsel %vm1498, %v2338, %v32
    %v2341 = vunpack.c.l.s4 1934713408
    %v2342 = vunpack.c.0.s8 %v2341
    %v2343 = vperm.slane %v2339, %v2342
    %v2344 = vrot.slane %v594, 4
    %v2345 = vsel %vm1498, %v2344, %v402
    %v2347 = vunpack.c.l.s4 1934713408
    %v2348 = vunpack.c.0.s8 %v2347
    %v2349 = vperm.slane %v2345, %v2348
    %v2350 = vrot.slane %v978, 4
    %v2351 = vsel %vm1498, %v2350, %v786
    %v2353 = vunpack.c.l.s4 1934713408
    %v2354 = vunpack.c.0.s8 %v2353
    %v2355 = vperm.slane %v2351, %v2354
    %v2356 = vrot.slane %v1362, 4
    %v2357 = vsel %vm1498, %v2356, %v1170
    %v2359 = vunpack.c.l.s4 1934713408
    %v2360 = vunpack.c.0.s8 %v2359
    %v2361 = vperm.slane %v2357, %v2360
    %v2362 = vrot.slane %v226, 4
    %v2363 = vsel %vm1498, %v2362, %v34
    %v2365 = vunpack.c.l.s4 1934713408
    %v2366 = vunpack.c.0.s8 %v2365
    %v2367 = vperm.slane %v2363, %v2366
    %v2368 = vrot.slane %v610, 4
    %v2369 = vsel %vm1498, %v2368, %v418
    %v2371 = vunpack.c.l.s4 1934713408
    %v2372 = vunpack.c.0.s8 %v2371
    %v2373 = vperm.slane %v2369, %v2372
    %v2374 = vrot.slane %v994, 4
    %v2375 = vsel %vm1498, %v2374, %v802
    %v2377 = vunpack.c.l.s4 1934713408
    %v2378 = vunpack.c.0.s8 %v2377
    %v2379 = vperm.slane %v2375, %v2378
    %v2380 = vrot.slane %v1378, 4
    %v2381 = vsel %vm1498, %v2380, %v1186
    %v2383 = vunpack.c.l.s4 1934713408
    %v2384 = vunpack.c.0.s8 %v2383
    %v2385 = vperm.slane %v2381, %v2384
    %v2386 = vrot.slane %v242, 4
    %v2387 = vsel %vm1498, %v2386, %v36
    %v2389 = vunpack.c.l.s4 1934713408
    %v2390 = vunpack.c.0.s8 %v2389
    %v2391 = vperm.slane %v2387, %v2390
    %v2392 = vrot.slane %v626, 4
    %v2393 = vsel %vm1498, %v2392, %v434
    %v2395 = vunpack.c.l.s4 1934713408
    %v2396 = vunpack.c.0.s8 %v2395
    %v2397 = vperm.slane %v2393, %v2396
    %v2398 = vrot.slane %v1010, 4
    %v2399 = vsel %vm1498, %v2398, %v818
    %v2401 = vunpack.c.l.s4 1934713408
    %v2402 = vunpack.c.0.s8 %v2401
    %v2403 = vperm.slane %v2399, %v2402
    %v2404 = vrot.slane %v1394, 4
    %v2405 = vsel %vm1498, %v2404, %v1202
    %v2407 = vunpack.c.l.s4 1934713408
    %v2408 = vunpack.c.0.s8 %v2407
    %v2409 = vperm.slane %v2405, %v2408
    %v2410 = vrot.slane %v258, 4
    %v2411 = vsel %vm1498, %v2410, %v38
    %v2413 = vunpack.c.l.s4 1934713408
    %v2414 = vunpack.c.0.s8 %v2413
    %v2415 = vperm.slane %v2411, %v2414
    %v2416 = vrot.slane %v642, 4
    %v2417 = vsel %vm1498, %v2416, %v450
    %v2419 = vunpack.c.l.s4 1934713408
    %v2420 = vunpack.c.0.s8 %v2419
    %v2421 = vperm.slane %v2417, %v2420
    %v2422 = vrot.slane %v1026, 4
    %v2423 = vsel %vm1498, %v2422, %v834
    %v2425 = vunpack.c.l.s4 1934713408
    %v2426 = vunpack.c.0.s8 %v2425
    %v2427 = vperm.slane %v2423, %v2426
    %v2428 = vrot.slane %v1410, 4
    %v2429 = vsel %vm1498, %v2428, %v1218
    %v2431 = vunpack.c.l.s4 1934713408
    %v2432 = vunpack.c.0.s8 %v2431
    %v2433 = vperm.slane %v2429, %v2432
    %v2434 = vrot.slane %v274, 4
    %v2435 = vsel %vm1498, %v2434, %v40
    %v2437 = vunpack.c.l.s4 1934713408
    %v2438 = vunpack.c.0.s8 %v2437
    %v2439 = vperm.slane %v2435, %v2438
    %v2440 = vrot.slane %v658, 4
    %v2441 = vsel %vm1498, %v2440, %v466
    %v2443 = vunpack.c.l.s4 1934713408
    %v2444 = vunpack.c.0.s8 %v2443
    %v2445 = vperm.slane %v2441, %v2444
    %v2446 = vrot.slane %v1042, 4
    %v2447 = vsel %vm1498, %v2446, %v850
    %v2449 = vunpack.c.l.s4 1934713408
    %v2450 = vunpack.c.0.s8 %v2449
    %v2451 = vperm.slane %v2447, %v2450
    %v2452 = vrot.slane %v1426, 4
    %v2453 = vsel %vm1498, %v2452, %v1234
    %v2455 = vunpack.c.l.s4 1934713408
    %v2456 = vunpack.c.0.s8 %v2455
    %v2457 = vperm.slane %v2453, %v2456
    %v2458 = vrot.slane %v164, 4
    %v2459 = vsel %vm1498, %v2458, %v60
    %v2461 = vunpack.c.l.s4 1934713408
    %v2462 = vunpack.c.0.s8 %v2461
    %v2463 = vperm.slane %v2459, %v2462
    %v2464 = vrot.slane %v548, 4
    %v2465 = vsel %vm1498, %v2464, %v356
    %v2467 = vunpack.c.l.s4 1934713408
    %v2468 = vunpack.c.0.s8 %v2467
    %v2469 = vperm.slane %v2465, %v2468
    %v2470 = vrot.slane %v932, 4
    %v2471 = vsel %vm1498, %v2470, %v740
    %v2473 = vunpack.c.l.s4 1934713408
    %v2474 = vunpack.c.0.s8 %v2473
    %v2475 = vperm.slane %v2471, %v2474
    %v2476 = vrot.slane %v1316, 4
    %v2477 = vsel %vm1498, %v2476, %v1124
    %v2479 = vunpack.c.l.s4 1934713408
    %v2480 = vunpack.c.0.s8 %v2479
    %v2481 = vperm.slane %v2477, %v2480
    %v2482 = vrot.slane %v180, 4
    %v2483 = vsel %vm1498, %v2482, %v66
    %v2485 = vunpack.c.l.s4 1934713408
    %v2486 = vunpack.c.0.s8 %v2485
    %v2487 = vperm.slane %v2483, %v2486
    %v2488 = vrot.slane %v564, 4
    %v2489 = vsel %vm1498, %v2488, %v372
    %v2491 = vunpack.c.l.s4 1934713408
    %v2492 = vunpack.c.0.s8 %v2491
    %v2493 = vperm.slane %v2489, %v2492
    %v2494 = vrot.slane %v948, 4
    %v2495 = vsel %vm1498, %v2494, %v756
    %v2497 = vunpack.c.l.s4 1934713408
    %v2498 = vunpack.c.0.s8 %v2497
    %v2499 = vperm.slane %v2495, %v2498
    %v2500 = vrot.slane %v1332, 4
    %v2501 = vsel %vm1498, %v2500, %v1140
    %v2503 = vunpack.c.l.s4 1934713408
    %v2504 = vunpack.c.0.s8 %v2503
    %v2505 = vperm.slane %v2501, %v2504
    %v2506 = vrot.slane %v196, 4
    %v2507 = vsel %vm1498, %v2506, %v72
    %v2509 = vunpack.c.l.s4 1934713408
    %v2510 = vunpack.c.0.s8 %v2509
    %v2511 = vperm.slane %v2507, %v2510
    %v2512 = vrot.slane %v580, 4
    %v2513 = vsel %vm1498, %v2512, %v388
    %v2515 = vunpack.c.l.s4 1934713408
    %v2516 = vunpack.c.0.s8 %v2515
    %v2517 = vperm.slane %v2513, %v2516
    %v2518 = vrot.slane %v964, 4
    %v2519 = vsel %vm1498, %v2518, %v772
    %v2521 = vunpack.c.l.s4 1934713408
    %v2522 = vunpack.c.0.s8 %v2521
    %v2523 = vperm.slane %v2519, %v2522
    %v2524 = vrot.slane %v1348, 4
    %v2525 = vsel %vm1498, %v2524, %v1156
    %v2527 = vunpack.c.l.s4 1934713408
    %v2528 = vunpack.c.0.s8 %v2527
    %v2529 = vperm.slane %v2525, %v2528
    %v2530 = vrot.slane %v212, 4
    %v2531 = vsel %vm1498, %v2530, %v78
    %v2533 = vunpack.c.l.s4 1934713408
    %v2534 = vunpack.c.0.s8 %v2533
    %v2535 = vperm.slane %v2531, %v2534
    %v2536 = vrot.slane %v596, 4
    %v2537 = vsel %vm1498, %v2536, %v404
    %v2539 = vunpack.c.l.s4 1934713408
    %v2540 = vunpack.c.0.s8 %v2539
    %v2541 = vperm.slane %v2537, %v2540
    %v2542 = vrot.slane %v980, 4
    %v2543 = vsel %vm1498, %v2542, %v788
    %v2545 = vunpack.c.l.s4 1934713408
    %v2546 = vunpack.c.0.s8 %v2545
    %v2547 = vperm.slane %v2543, %v2546
    %v2548 = vrot.slane %v1364, 4
    %v2549 = vsel %vm1498, %v2548, %v1172
    %v2551 = vunpack.c.l.s4 1934713408
    %v2552 = vunpack.c.0.s8 %v2551
    %v2553 = vperm.slane %v2549, %v2552
    %v2554 = vrot.slane %v228, 4
    %v2555 = vsel %vm1498, %v2554, %v84
    %v2557 = vunpack.c.l.s4 1934713408
    %v2558 = vunpack.c.0.s8 %v2557
    %v2559 = vperm.slane %v2555, %v2558
    %v2560 = vrot.slane %v612, 4
    %v2561 = vsel %vm1498, %v2560, %v420
    %v2563 = vunpack.c.l.s4 1934713408
    %v2564 = vunpack.c.0.s8 %v2563
    %v2565 = vperm.slane %v2561, %v2564
    %v2566 = vrot.slane %v996, 4
    %v2567 = vsel %vm1498, %v2566, %v804
    %v2569 = vunpack.c.l.s4 1934713408
    %v2570 = vunpack.c.0.s8 %v2569
    %v2571 = vperm.slane %v2567, %v2570
    %v2572 = vrot.slane %v1380, 4
    %v2573 = vsel %vm1498, %v2572, %v1188
    %v2575 = vunpack.c.l.s4 1934713408
    %v2576 = vunpack.c.0.s8 %v2575
    %v2577 = vperm.slane %v2573, %v2576
    %v2578 = vrot.slane %v244, 4
    %v2579 = vsel %vm1498, %v2578, %v90
    %v2581 = vunpack.c.l.s4 1934713408
    %v2582 = vunpack.c.0.s8 %v2581
    %v2583 = vperm.slane %v2579, %v2582
    %v2584 = vrot.slane %v628, 4
    %v2585 = vsel %vm1498, %v2584, %v436
    %v2587 = vunpack.c.l.s4 1934713408
    %v2588 = vunpack.c.0.s8 %v2587
    %v2589 = vperm.slane %v2585, %v2588
    %v2590 = vrot.slane %v1012, 4
    %v2591 = vsel %vm1498, %v2590, %v820
    %v2593 = vunpack.c.l.s4 1934713408
    %v2594 = vunpack.c.0.s8 %v2593
    %v2595 = vperm.slane %v2591, %v2594
    %v2596 = vrot.slane %v1396, 4
    %v2597 = vsel %vm1498, %v2596, %v1204
    %v2599 = vunpack.c.l.s4 1934713408
    %v2600 = vunpack.c.0.s8 %v2599
    %v2601 = vperm.slane %v2597, %v2600
    %v2602 = vrot.slane %v260, 4
    %v2603 = vsel %vm1498, %v2602, %v96
    %v2605 = vunpack.c.l.s4 1934713408
    %v2606 = vunpack.c.0.s8 %v2605
    %v2607 = vperm.slane %v2603, %v2606
    %v2608 = vrot.slane %v644, 4
    %v2609 = vsel %vm1498, %v2608, %v452
    %v2611 = vunpack.c.l.s4 1934713408
    %v2612 = vunpack.c.0.s8 %v2611
    %v2613 = vperm.slane %v2609, %v2612
    %v2614 = vrot.slane %v1028, 4
    %v2615 = vsel %vm1498, %v2614, %v836
    %v2617 = vunpack.c.l.s4 1934713408
    %v2618 = vunpack.c.0.s8 %v2617
    %v2619 = vperm.slane %v2615, %v2618
    %v2620 = vrot.slane %v1412, 4
    %v2621 = vsel %vm1498, %v2620, %v1220
    %v2623 = vunpack.c.l.s4 1934713408
    %v2624 = vunpack.c.0.s8 %v2623
    %v2625 = vperm.slane %v2621, %v2624
    %v2626 = vrot.slane %v276, 4
    %v2627 = vsel %vm1498, %v2626, %v102
    %v2629 = vunpack.c.l.s4 1934713408
    %v2630 = vunpack.c.0.s8 %v2629
    %v2631 = vperm.slane %v2627, %v2630
    %v2632 = vrot.slane %v660, 4
    %v2633 = vsel %vm1498, %v2632, %v468
    %v2635 = vunpack.c.l.s4 1934713408
    %v2636 = vunpack.c.0.s8 %v2635
    %v2637 = vperm.slane %v2633, %v2636
    %v2638 = vrot.slane %v1044, 4
    %v2639 = vsel %vm1498, %v2638, %v852
    %v2641 = vunpack.c.l.s4 1934713408
    %v2642 = vunpack.c.0.s8 %v2641
    %v2643 = vperm.slane %v2639, %v2642
    %v2644 = vrot.slane %v1428, 4
    %v2645 = vsel %vm1498, %v2644, %v1236
    %v2647 = vunpack.c.l.s4 1934713408
    %v2648 = vunpack.c.0.s8 %v2647
    %v2649 = vperm.slane %v2645, %v2648
    %v2650 = vrot.slane %v166, 4
    %v2651 = vsel %vm1498, %v2650, %v61
    %v2653 = vunpack.c.l.s4 1934713408
    %v2654 = vunpack.c.0.s8 %v2653
    %v2655 = vperm.slane %v2651, %v2654
    %v2656 = vrot.slane %v550, 4
    %v2657 = vsel %vm1498, %v2656, %v358
    %v2659 = vunpack.c.l.s4 1934713408
    %v2660 = vunpack.c.0.s8 %v2659
    %v2661 = vperm.slane %v2657, %v2660
    %v2662 = vrot.slane %v934, 4
    %v2663 = vsel %vm1498, %v2662, %v742
    %v2665 = vunpack.c.l.s4 1934713408
    %v2666 = vunpack.c.0.s8 %v2665
    %v2667 = vperm.slane %v2663, %v2666
    %v2668 = vrot.slane %v1318, 4
    %v2669 = vsel %vm1498, %v2668, %v1126
    %v2671 = vunpack.c.l.s4 1934713408
    %v2672 = vunpack.c.0.s8 %v2671
    %v2673 = vperm.slane %v2669, %v2672
    %v2674 = vrot.slane %v182, 4
    %v2675 = vsel %vm1498, %v2674, %v67
    %v2677 = vunpack.c.l.s4 1934713408
    %v2678 = vunpack.c.0.s8 %v2677
    %v2679 = vperm.slane %v2675, %v2678
    %v2680 = vrot.slane %v566, 4
    %v2681 = vsel %vm1498, %v2680, %v374
    %v2683 = vunpack.c.l.s4 1934713408
    %v2684 = vunpack.c.0.s8 %v2683
    %v2685 = vperm.slane %v2681, %v2684
    %v2686 = vrot.slane %v950, 4
    %v2687 = vsel %vm1498, %v2686, %v758
    %v2689 = vunpack.c.l.s4 1934713408
    %v2690 = vunpack.c.0.s8 %v2689
    %v2691 = vperm.slane %v2687, %v2690
    %v2692 = vrot.slane %v1334, 4
    %v2693 = vsel %vm1498, %v2692, %v1142
    %v2695 = vunpack.c.l.s4 1934713408
    %v2696 = vunpack.c.0.s8 %v2695
    %v2697 = vperm.slane %v2693, %v2696
    %v2698 = vrot.slane %v198, 4
    %v2699 = vsel %vm1498, %v2698, %v73
    %v2701 = vunpack.c.l.s4 1934713408
    %v2702 = vunpack.c.0.s8 %v2701
    %v2703 = vperm.slane %v2699, %v2702
    %v2704 = vrot.slane %v582, 4
    %v2705 = vsel %vm1498, %v2704, %v390
    %v2707 = vunpack.c.l.s4 1934713408
    %v2708 = vunpack.c.0.s8 %v2707
    %v2709 = vperm.slane %v2705, %v2708
    %v2710 = vrot.slane %v966, 4
    %v2711 = vsel %vm1498, %v2710, %v774
    %v2713 = vunpack.c.l.s4 1934713408
    %v2714 = vunpack.c.0.s8 %v2713
    %v2715 = vperm.slane %v2711, %v2714
    %v2716 = vrot.slane %v1350, 4
    %v2717 = vsel %vm1498, %v2716, %v1158
    %v2719 = vunpack.c.l.s4 1934713408
    %v2720 = vunpack.c.0.s8 %v2719
    %v2721 = vperm.slane %v2717, %v2720
    %v2722 = vrot.slane %v214, 4
    %v2723 = vsel %vm1498, %v2722, %v79
    %v2725 = vunpack.c.l.s4 1934713408
    %v2726 = vunpack.c.0.s8 %v2725
    %v2727 = vperm.slane %v2723, %v2726
    %v2728 = vrot.slane %v598, 4
    %v2729 = vsel %vm1498, %v2728, %v406
    %v2731 = vunpack.c.l.s4 1934713408
    %v2732 = vunpack.c.0.s8 %v2731
    %v2733 = vperm.slane %v2729, %v2732
    %v2734 = vrot.slane %v982, 4
    %v2735 = vsel %vm1498, %v2734, %v790
    %v2737 = vunpack.c.l.s4 1934713408
    %v2738 = vunpack.c.0.s8 %v2737
    %v2739 = vperm.slane %v2735, %v2738
    %v2740 = vrot.slane %v1366, 4
    %v2741 = vsel %vm1498, %v2740, %v1174
    %v2743 = vunpack.c.l.s4 1934713408
    %v2744 = vunpack.c.0.s8 %v2743
    %v2745 = vperm.slane %v2741, %v2744
    %v2746 = vrot.slane %v230, 4
    %v2747 = vsel %vm1498, %v2746, %v85
    %v2749 = vunpack.c.l.s4 1934713408
    %v2750 = vunpack.c.0.s8 %v2749
    %v2751 = vperm.slane %v2747, %v2750
    %v2752 = vrot.slane %v614, 4
    %v2753 = vsel %vm1498, %v2752, %v422
    %v2755 = vunpack.c.l.s4 1934713408
    %v2756 = vunpack.c.0.s8 %v2755
    %v2757 = vperm.slane %v2753, %v2756
    %v2758 = vrot.slane %v998, 4
    %v2759 = vsel %vm1498, %v2758, %v806
    %v2761 = vunpack.c.l.s4 1934713408
    %v2762 = vunpack.c.0.s8 %v2761
    %v2763 = vperm.slane %v2759, %v2762
    %v2764 = vrot.slane %v1382, 4
    %v2765 = vsel %vm1498, %v2764, %v1190
    %v2767 = vunpack.c.l.s4 1934713408
    %v2768 = vunpack.c.0.s8 %v2767
    %v2769 = vperm.slane %v2765, %v2768
    %v2770 = vrot.slane %v246, 4
    %v2771 = vsel %vm1498, %v2770, %v91
    %v2773 = vunpack.c.l.s4 1934713408
    %v2774 = vunpack.c.0.s8 %v2773
    %v2775 = vperm.slane %v2771, %v2774
    %v2776 = vrot.slane %v630, 4
    %v2777 = vsel %vm1498, %v2776, %v438
    %v2779 = vunpack.c.l.s4 1934713408
    %v2780 = vunpack.c.0.s8 %v2779
    %v2781 = vperm.slane %v2777, %v2780
    %v2782 = vrot.slane %v1014, 4
    %v2783 = vsel %vm1498, %v2782, %v822
    %v2785 = vunpack.c.l.s4 1934713408
    %v2786 = vunpack.c.0.s8 %v2785
    %v2787 = vperm.slane %v2783, %v2786
    %v2788 = vrot.slane %v1398, 4
    %v2789 = vsel %vm1498, %v2788, %v1206
    %v2791 = vunpack.c.l.s4 1934713408
    %v2792 = vunpack.c.0.s8 %v2791
    %v2793 = vperm.slane %v2789, %v2792
    %v2794 = vrot.slane %v262, 4
    %v2795 = vsel %vm1498, %v2794, %v97
    %v2797 = vunpack.c.l.s4 1934713408
    %v2798 = vunpack.c.0.s8 %v2797
    %v2799 = vperm.slane %v2795, %v2798
    %v2800 = vrot.slane %v646, 4
    %v2801 = vsel %vm1498, %v2800, %v454
    %v2803 = vunpack.c.l.s4 1934713408
    %v2804 = vunpack.c.0.s8 %v2803
    %v2805 = vperm.slane %v2801, %v2804
    %v2806 = vrot.slane %v1030, 4
    %v2807 = vsel %vm1498, %v2806, %v838
    %v2809 = vunpack.c.l.s4 1934713408
    %v2810 = vunpack.c.0.s8 %v2809
    %v2811 = vperm.slane %v2807, %v2810
    %v2812 = vrot.slane %v1414, 4
    %v2813 = vsel %vm1498, %v2812, %v1222
    %v2815 = vunpack.c.l.s4 1934713408
    %v2816 = vunpack.c.0.s8 %v2815
    %v2817 = vperm.slane %v2813, %v2816
    %v2818 = vrot.slane %v278, 4
    %v2819 = vsel %vm1498, %v2818, %v103
    %v2821 = vunpack.c.l.s4 1934713408
    %v2822 = vunpack.c.0.s8 %v2821
    %v2823 = vperm.slane %v2819, %v2822
    %v2824 = vrot.slane %v662, 4
    %v2825 = vsel %vm1498, %v2824, %v470
    %v2827 = vunpack.c.l.s4 1934713408
    %v2828 = vunpack.c.0.s8 %v2827
    %v2829 = vperm.slane %v2825, %v2828
    %v2830 = vrot.slane %v1046, 4
    %v2831 = vsel %vm1498, %v2830, %v854
    %v2833 = vunpack.c.l.s4 1934713408
    %v2834 = vunpack.c.0.s8 %v2833
    %v2835 = vperm.slane %v2831, %v2834
    %v2836 = vrot.slane %v1430, 4
    %v2837 = vsel %vm1498, %v2836, %v1238
    %v2839 = vunpack.c.l.s4 1934713408
    %v2840 = vunpack.c.0.s8 %v2839
    %v2841 = vperm.slane %v2837, %v2840
    %v2842 = vrot.slane %v168, 4
    %v2843 = vsel %vm1498, %v2842, %v62
    %v2845 = vunpack.c.l.s4 1934713408
    %v2846 = vunpack.c.0.s8 %v2845
    %v2847 = vperm.slane %v2843, %v2846
    %v2848 = vrot.slane %v552, 4
    %v2849 = vsel %vm1498, %v2848, %v360
    %v2851 = vunpack.c.l.s4 1934713408
    %v2852 = vunpack.c.0.s8 %v2851
    %v2853 = vperm.slane %v2849, %v2852
    %v2854 = vrot.slane %v936, 4
    %v2855 = vsel %vm1498, %v2854, %v744
    %v2857 = vunpack.c.l.s4 1934713408
    %v2858 = vunpack.c.0.s8 %v2857
    %v2859 = vperm.slane %v2855, %v2858
    %v2860 = vrot.slane %v1320, 4
    %v2861 = vsel %vm1498, %v2860, %v1128
    %v2863 = vunpack.c.l.s4 1934713408
    %v2864 = vunpack.c.0.s8 %v2863
    %v2865 = vperm.slane %v2861, %v2864
    %v2866 = vrot.slane %v184, 4
    %v2867 = vsel %vm1498, %v2866, %v68
    %v2869 = vunpack.c.l.s4 1934713408
    %v2870 = vunpack.c.0.s8 %v2869
    %v2871 = vperm.slane %v2867, %v2870
    %v2872 = vrot.slane %v568, 4
    %v2873 = vsel %vm1498, %v2872, %v376
    %v2875 = vunpack.c.l.s4 1934713408
    %v2876 = vunpack.c.0.s8 %v2875
    %v2877 = vperm.slane %v2873, %v2876
    %v2878 = vrot.slane %v952, 4
    %v2879 = vsel %vm1498, %v2878, %v760
    %v2881 = vunpack.c.l.s4 1934713408
    %v2882 = vunpack.c.0.s8 %v2881
    %v2883 = vperm.slane %v2879, %v2882
    %v2884 = vrot.slane %v1336, 4
    %v2885 = vsel %vm1498, %v2884, %v1144
    %v2887 = vunpack.c.l.s4 1934713408
    %v2888 = vunpack.c.0.s8 %v2887
    %v2889 = vperm.slane %v2885, %v2888
    %v2890 = vrot.slane %v200, 4
    %v2891 = vsel %vm1498, %v2890, %v74
    %v2893 = vunpack.c.l.s4 1934713408
    %v2894 = vunpack.c.0.s8 %v2893
    %v2895 = vperm.slane %v2891, %v2894
    %v2896 = vrot.slane %v584, 4
    %v2897 = vsel %vm1498, %v2896, %v392
    %v2899 = vunpack.c.l.s4 1934713408
    %v2900 = vunpack.c.0.s8 %v2899
    %v2901 = vperm.slane %v2897, %v2900
    %v2902 = vrot.slane %v968, 4
    %v2903 = vsel %vm1498, %v2902, %v776
    %v2905 = vunpack.c.l.s4 1934713408
    %v2906 = vunpack.c.0.s8 %v2905
    %v2907 = vperm.slane %v2903, %v2906
    %v2908 = vrot.slane %v1352, 4
    %v2909 = vsel %vm1498, %v2908, %v1160
    %v2911 = vunpack.c.l.s4 1934713408
    %v2912 = vunpack.c.0.s8 %v2911
    %v2913 = vperm.slane %v2909, %v2912
    %v2914 = vrot.slane %v216, 4
    %v2915 = vsel %vm1498, %v2914, %v80
    %v2917 = vunpack.c.l.s4 1934713408
    %v2918 = vunpack.c.0.s8 %v2917
    %v2919 = vperm.slane %v2915, %v2918
    %v2920 = vrot.slane %v600, 4
    %v2921 = vsel %vm1498, %v2920, %v408
    %v2923 = vunpack.c.l.s4 1934713408
    %v2924 = vunpack.c.0.s8 %v2923
    %v2925 = vperm.slane %v2921, %v2924
    %v2926 = vrot.slane %v984, 4
    %v2927 = vsel %vm1498, %v2926, %v792
    %v2929 = vunpack.c.l.s4 1934713408
    %v2930 = vunpack.c.0.s8 %v2929
    %v2931 = vperm.slane %v2927, %v2930
    %v2932 = vrot.slane %v1368, 4
    %v2933 = vsel %vm1498, %v2932, %v1176
    %v2935 = vunpack.c.l.s4 1934713408
    %v2936 = vunpack.c.0.s8 %v2935
    %v2937 = vperm.slane %v2933, %v2936
    %v2938 = vrot.slane %v232, 4
    %v2939 = vsel %vm1498, %v2938, %v86
    %v2941 = vunpack.c.l.s4 1934713408
    %v2942 = vunpack.c.0.s8 %v2941
    %v2943 = vperm.slane %v2939, %v2942
    %v2944 = vrot.slane %v616, 4
    %v2945 = vsel %vm1498, %v2944, %v424
    %v2947 = vunpack.c.l.s4 1934713408
    %v2948 = vunpack.c.0.s8 %v2947
    %v2949 = vperm.slane %v2945, %v2948
    %v2950 = vrot.slane %v1000, 4
    %v2951 = vsel %vm1498, %v2950, %v808
    %v2953 = vunpack.c.l.s4 1934713408
    %v2954 = vunpack.c.0.s8 %v2953
    %v2955 = vperm.slane %v2951, %v2954
    %v2956 = vrot.slane %v1384, 4
    %v2957 = vsel %vm1498, %v2956, %v1192
    %v2959 = vunpack.c.l.s4 1934713408
    %v2960 = vunpack.c.0.s8 %v2959
    %v2961 = vperm.slane %v2957, %v2960
    %v2962 = vrot.slane %v248, 4
    %v2963 = vsel %vm1498, %v2962, %v92
    %v2965 = vunpack.c.l.s4 1934713408
    %v2966 = vunpack.c.0.s8 %v2965
    %v2967 = vperm.slane %v2963, %v2966
    %v2968 = vrot.slane %v632, 4
    %v2969 = vsel %vm1498, %v2968, %v440
    %v2971 = vunpack.c.l.s4 1934713408
    %v2972 = vunpack.c.0.s8 %v2971
    %v2973 = vperm.slane %v2969, %v2972
    %v2974 = vrot.slane %v1016, 4
    %v2975 = vsel %vm1498, %v2974, %v824
    %v2977 = vunpack.c.l.s4 1934713408
    %v2978 = vunpack.c.0.s8 %v2977
    %v2979 = vperm.slane %v2975, %v2978
    %v2980 = vrot.slane %v1400, 4
    %v2981 = vsel %vm1498, %v2980, %v1208
    %v2983 = vunpack.c.l.s4 1934713408
    %v2984 = vunpack.c.0.s8 %v2983
    %v2985 = vperm.slane %v2981, %v2984
    %v2986 = vrot.slane %v264, 4
    %v2987 = vsel %vm1498, %v2986, %v98
    %v2989 = vunpack.c.l.s4 1934713408
    %v2990 = vunpack.c.0.s8 %v2989
    %v2991 = vperm.slane %v2987, %v2990
    %v2992 = vrot.slane %v648, 4
    %v2993 = vsel %vm1498, %v2992, %v456
    %v2995 = vunpack.c.l.s4 1934713408
    %v2996 = vunpack.c.0.s8 %v2995
    %v2997 = vperm.slane %v2993, %v2996
    %v2998 = vrot.slane %v1032, 4
    %v2999 = vsel %vm1498, %v2998, %v840
    %v3001 = vunpack.c.l.s4 1934713408
    %v3002 = vunpack.c.0.s8 %v3001
    %v3003 = vperm.slane %v2999, %v3002
    %v3004 = vrot.slane %v1416, 4
    %v3005 = vsel %vm1498, %v3004, %v1224
    %v3007 = vunpack.c.l.s4 1934713408
    %v3008 = vunpack.c.0.s8 %v3007
    %v3009 = vperm.slane %v3005, %v3008
    %v3010 = vrot.slane %v280, 4
    %v3011 = vsel %vm1498, %v3010, %v104
    %v3013 = vunpack.c.l.s4 1934713408
    %v3014 = vunpack.c.0.s8 %v3013
    %v3015 = vperm.slane %v3011, %v3014
    %v3016 = vrot.slane %v664, 4
    %v3017 = vsel %vm1498, %v3016, %v472
    %v3019 = vunpack.c.l.s4 1934713408
    %v3020 = vunpack.c.0.s8 %v3019
    %v3021 = vperm.slane %v3017, %v3020
    %v3022 = vrot.slane %v1048, 4
    %v3023 = vsel %vm1498, %v3022, %v856
    %v3025 = vunpack.c.l.s4 1934713408
    %v3026 = vunpack.c.0.s8 %v3025
    %v3027 = vperm.slane %v3023, %v3026
    %v3028 = vrot.slane %v1432, 4
    %v3029 = vsel %vm1498, %v3028, %v1240
    %v3031 = vunpack.c.l.s4 1934713408
    %v3032 = vunpack.c.0.s8 %v3031
    %v3033 = vperm.slane %v3029, %v3032
    %3290 = vst [vmem:[#allocation1] ss:$4 sm:$0xff] %v1503
    %s3291 = scalar_lea.vmem [#allocation1], 1
    %3292 = vst [vmem:[%s3291] ss:$4 sm:$0xff] %v1509
    %s3293 = scalar_lea.vmem [#allocation1], 2
    %3294 = vst [vmem:[%s3293] ss:$4 sm:$0xff] %v1515
    %s3295 = scalar_lea.vmem [#allocation1], 3
    %3296 = vst [vmem:[%s3295] ss:$4 sm:$0xff] %v1521
    %v3297 = vld.sshfl [vmem:[#allocation1] sm:$0xff pattern:$0x73625140]
    %s3298 = scalar_lea.vmem [#allocation1], 32
    %3299 = vst [vmem:[%s3298] ss:$4 sm:$0xff] %v1695
    %s3300 = scalar_lea.vmem [#allocation1], 33
    %3301 = vst [vmem:[%s3300] ss:$4 sm:$0xff] %v1701
    %s3302 = scalar_lea.vmem [#allocation1], 34
    %3303 = vst [vmem:[%s3302] ss:$4 sm:$0xff] %v1707
    %s3304 = scalar_lea.vmem [#allocation1], 35
    %3305 = vst [vmem:[%s3304] ss:$4 sm:$0xff] %v1713
    %v3306 = vld.sshfl [vmem:[#allocation1 + $0x20] sm:$0xff pattern:$0x73625140]
    %3307 = vst [vmem:[#allocation1] ss:$4 sm:$0xff] %v1887
    %3308 = vst [vmem:[%s3291] ss:$4 sm:$0xff] %v1893
    %3309 = vst [vmem:[%s3293] ss:$4 sm:$0xff] %v1899
    %3310 = vst [vmem:[%s3295] ss:$4 sm:$0xff] %v1905
    %v3311 = vld.sshfl [vmem:[#allocation1] sm:$0xff pattern:$0x73625140]
    %3312 = vst [vmem:[%s3298] ss:$4 sm:$0xff] %v2079
    %3313 = vst [vmem:[%s3300] ss:$4 sm:$0xff] %v2085
    %3314 = vst [vmem:[%s3302] ss:$4 sm:$0xff] %v2091
    %3315 = vst [vmem:[%s3304] ss:$4 sm:$0xff] %v2097
    %v3316 = vld.sshfl [vmem:[#allocation1 + $0x20] sm:$0xff pattern:$0x73625140]
    %3317 = vst [vmem:[#allocation1] ss:$4 sm:$0xff] %v2271
    %3318 = vst [vmem:[%s3291] ss:$4 sm:$0xff] %v2277
    %3319 = vst [vmem:[%s3293] ss:$4 sm:$0xff] %v2283
    %3320 = vst [vmem:[%s3295] ss:$4 sm:$0xff] %v2289
    %v3321 = vld.sshfl [vmem:[#allocation1] sm:$0xff pattern:$0x73625140]
    %3322 = vst [vmem:[%s3298] ss:$4 sm:$0xff] %v2463
    %3323 = vst [vmem:[%s3300] ss:$4 sm:$0xff] %v2469
    %3324 = vst [vmem:[%s3302] ss:$4 sm:$0xff] %v2475
    %3325 = vst [vmem:[%s3304] ss:$4 sm:$0xff] %v2481
    %v3326 = vld.sshfl [vmem:[#allocation1 + $0x20] sm:$0xff pattern:$0x73625140]
    %3327 = vst [vmem:[#allocation1] ss:$4 sm:$0xff] %v2655
    %3328 = vst [vmem:[%s3291] ss:$4 sm:$0xff] %v2661
    %3329 = vst [vmem:[%s3293] ss:$4 sm:$0xff] %v2667
    %3330 = vst [vmem:[%s3295] ss:$4 sm:$0xff] %v2673
    %v3331 = vld.sshfl [vmem:[#allocation1] sm:$0xff pattern:$0x73625140]
    %3332 = vst [vmem:[%s3298] ss:$4 sm:$0xff] %v2847
    %3333 = vst [vmem:[%s3300] ss:$4 sm:$0xff] %v2853
    %3334 = vst [vmem:[%s3302] ss:$4 sm:$0xff] %v2859
    %3335 = vst [vmem:[%s3304] ss:$4 sm:$0xff] %v2865
    %v3336 = vld.sshfl [vmem:[#allocation1 + $0x20] sm:$0xff pattern:$0x73625140]
    %3337 = vst [vmem:[#allocation1] ss:$4 sm:$0xff] %v1527
    %3338 = vst [vmem:[%s3291] ss:$4 sm:$0xff] %v1533
    %3339 = vst [vmem:[%s3293] ss:$4 sm:$0xff] %v1539
    %3340 = vst [vmem:[%s3295] ss:$4 sm:$0xff] %v1545
    %v3341 = vld.sshfl [vmem:[#allocation1] sm:$0xff pattern:$0x73625140]
    %3342 = vst [vmem:[%s3298] ss:$4 sm:$0xff] %v1719
    %3343 = vst [vmem:[%s3300] ss:$4 sm:$0xff] %v1725
    %3344 = vst [vmem:[%s3302] ss:$4 sm:$0xff] %v1731
    %3345 = vst [vmem:[%s3304] ss:$4 sm:$0xff] %v1737
    %v3346 = vld.sshfl [vmem:[#allocation1 + $0x20] sm:$0xff pattern:$0x73625140]
    %3347 = vst [vmem:[#allocation1] ss:$4 sm:$0xff] %v1911
    %3348 = vst [vmem:[%s3291] ss:$4 sm:$0xff] %v1917
    %3349 = vst [vmem:[%s3293] ss:$4 sm:$0xff] %v1923
    %3350 = vst [vmem:[%s3295] ss:$4 sm:$0xff] %v1929
    %v3351 = vld.sshfl [vmem:[#allocation1] sm:$0xff pattern:$0x73625140]
    %3352 = vst [vmem:[%s3298] ss:$4 sm:$0xff] %v2103
    %3353 = vst [vmem:[%s3300] ss:$4 sm:$0xff] %v2109
    %3354 = vst [vmem:[%s3302] ss:$4 sm:$0xff] %v2115
    %3355 = vst [vmem:[%s3304] ss:$4 sm:$0xff] %v2121
    %v3356 = vld.sshfl [vmem:[#allocation1 + $0x20] sm:$0xff pattern:$0x73625140]
    %3357 = vst [vmem:[#allocation1] ss:$4 sm:$0xff] %v2295
    %3358 = vst [vmem:[%s3291] ss:$4 sm:$0xff] %v2301
    %3359 = vst [vmem:[%s3293] ss:$4 sm:$0xff] %v2307
    %3360 = vst [vmem:[%s3295] ss:$4 sm:$0xff] %v2313
    %v3361 = vld.sshfl [vmem:[#allocation1] sm:$0xff pattern:$0x73625140]
    %3362 = vst [vmem:[%s3298] ss:$4 sm:$0xff] %v2487
    %3363 = vst [vmem:[%s3300] ss:$4 sm:$0xff] %v2493
    %3364 = vst [vmem:[%s3302] ss:$4 sm:$0xff] %v2499
    %3365 = vst [vmem:[%s3304] ss:$4 sm:$0xff] %v2505
    %v3366 = vld.sshfl [vmem:[#allocation1 + $0x20] sm:$0xff pattern:$0x73625140]
    %3367 = vst [vmem:[#allocation1] ss:$4 sm:$0xff] %v2679
    %3368 = vst [vmem:[%s3291] ss:$4 sm:$0xff] %v2685
    %3369 = vst [vmem:[%s3293] ss:$4 sm:$0xff] %v2691
    %3370 = vst [vmem:[%s3295] ss:$4 sm:$0xff] %v2697
    %v3371 = vld.sshfl [vmem:[#allocation1] sm:$0xff pattern:$0x73625140]
    %3372 = vst [vmem:[%s3298] ss:$4 sm:$0xff] %v2871
    %3373 = vst [vmem:[%s3300] ss:$4 sm:$0xff] %v2877
    %3374 = vst [vmem:[%s3302] ss:$4 sm:$0xff] %v2883
    %3375 = vst [vmem:[%s3304] ss:$4 sm:$0xff] %v2889
    %v3376 = vld.sshfl [vmem:[#allocation1 + $0x20] sm:$0xff pattern:$0x73625140]
    %3377 = vst [vmem:[#allocation1] ss:$4 sm:$0xff] %v1551
    %3378 = vst [vmem:[%s3291] ss:$4 sm:$0xff] %v1557
    %3379 = vst [vmem:[%s3293] ss:$4 sm:$0xff] %v1563
    %3380 = vst [vmem:[%s3295] ss:$4 sm:$0xff] %v1569
    %v3381 = vld.sshfl [vmem:[#allocation1] sm:$0xff pattern:$0x73625140]
    %3382 = vst [vmem:[%s3298] ss:$4 sm:$0xff] %v1743
    %3383 = vst [vmem:[%s3300] ss:$4 sm:$0xff] %v1749
    %3384 = vst [vmem:[%s3302] ss:$4 sm:$0xff] %v1755
    %3385 = vst [vmem:[%s3304] ss:$4 sm:$0xff] %v1761
    %v3386 = vld.sshfl [vmem:[#allocation1 + $0x20] sm:$0xff pattern:$0x73625140]
    %3387 = vst [vmem:[#allocation1] ss:$4 sm:$0xff] %v1935
    %3388 = vst [vmem:[%s3291] ss:$4 sm:$0xff] %v1941
    %3389 = vst [vmem:[%s3293] ss:$4 sm:$0xff] %v1947
    %3390 = vst [vmem:[%s3295] ss:$4 sm:$0xff] %v1953
    %v3391 = vld.sshfl [vmem:[#allocation1] sm:$0xff pattern:$0x73625140]
    %3392 = vst [vmem:[%s3298] ss:$4 sm:$0xff] %v2127
    %3393 = vst [vmem:[%s3300] ss:$4 sm:$0xff] %v2133
    %3394 = vst [vmem:[%s3302] ss:$4 sm:$0xff] %v2139
    %3395 = vst [vmem:[%s3304] ss:$4 sm:$0xff] %v2145
    %v3396 = vld.sshfl [vmem:[#allocation1 + $0x20] sm:$0xff pattern:$0x73625140]
    %3397 = vst [vmem:[#allocation1] ss:$4 sm:$0xff] %v2319
    %3398 = vst [vmem:[%s3291] ss:$4 sm:$0xff] %v2325
    %3399 = vst [vmem:[%s3293] ss:$4 sm:$0xff] %v2331
    %3400 = vst [vmem:[%s3295] ss:$4 sm:$0xff] %v2337
    %v3401 = vld.sshfl [vmem:[#allocation1] sm:$0xff pattern:$0x73625140]
    %3402 = vst [vmem:[%s3298] ss:$4 sm:$0xff] %v2511
    %3403 = vst [vmem:[%s3300] ss:$4 sm:$0xff] %v2517
    %3404 = vst [vmem:[%s3302] ss:$4 sm:$0xff] %v2523
    %3405 = vst [vmem:[%s3304] ss:$4 sm:$0xff] %v2529
    %v3406 = vld.sshfl [vmem:[#allocation1 + $0x20] sm:$0xff pattern:$0x73625140]
    %3407 = vst [vmem:[#allocation1] ss:$4 sm:$0xff] %v2703
    %3408 = vst [vmem:[%s3291] ss:$4 sm:$0xff] %v2709
    %3409 = vst [vmem:[%s3293] ss:$4 sm:$0xff] %v2715
    %3410 = vst [vmem:[%s3295] ss:$4 sm:$0xff] %v2721
    %v3411 = vld.sshfl [vmem:[#allocation1] sm:$0xff pattern:$0x73625140]
    %3412 = vst [vmem:[%s3298] ss:$4 sm:$0xff] %v2895
    %3413 = vst [vmem:[%s3300] ss:$4 sm:$0xff] %v2901
    %3414 = vst [vmem:[%s3302] ss:$4 sm:$0xff] %v2907
    %3415 = vst [vmem:[%s3304] ss:$4 sm:$0xff] %v2913
    %v3416 = vld.sshfl [vmem:[#allocation1 + $0x20] sm:$0xff pattern:$0x73625140]
    %3417 = vst [vmem:[#allocation1] ss:$4 sm:$0xff] %v1575
    %3418 = vst [vmem:[%s3291] ss:$4 sm:$0xff] %v1581
    %3419 = vst [vmem:[%s3293] ss:$4 sm:$0xff] %v1587
    %3420 = vst [vmem:[%s3295] ss:$4 sm:$0xff] %v1593
    %v3421 = vld.sshfl [vmem:[#allocation1] sm:$0xff pattern:$0x73625140]
    %3422 = vst [vmem:[%s3298] ss:$4 sm:$0xff] %v1767
    %3423 = vst [vmem:[%s3300] ss:$4 sm:$0xff] %v1773
    %3424 = vst [vmem:[%s3302] ss:$4 sm:$0xff] %v1779
    %3425 = vst [vmem:[%s3304] ss:$4 sm:$0xff] %v1785
    %v3426 = vld.sshfl [vmem:[#allocation1 + $0x20] sm:$0xff pattern:$0x73625140]
    %3427 = vst [vmem:[#allocation1] ss:$4 sm:$0xff] %v1959
    %3428 = vst [vmem:[%s3291] ss:$4 sm:$0xff] %v1965
    %3429 = vst [vmem:[%s3293] ss:$4 sm:$0xff] %v1971
    %3430 = vst [vmem:[%s3295] ss:$4 sm:$0xff] %v1977
    %v3431 = vld.sshfl [vmem:[#allocation1] sm:$0xff pattern:$0x73625140]
    %3432 = vst [vmem:[%s3298] ss:$4 sm:$0xff] %v2151
    %3433 = vst [vmem:[%s3300] ss:$4 sm:$0xff] %v2157
    %3434 = vst [vmem:[%s3302] ss:$4 sm:$0xff] %v2163
    %3435 = vst [vmem:[%s3304] ss:$4 sm:$0xff] %v2169
    %v3436 = vld.sshfl [vmem:[#allocation1 + $0x20] sm:$0xff pattern:$0x73625140]
    %3437 = vst [vmem:[#allocation1] ss:$4 sm:$0xff] %v2343
    %3438 = vst [vmem:[%s3291] ss:$4 sm:$0xff] %v2349
    %3439 = vst [vmem:[%s3293] ss:$4 sm:$0xff] %v2355
    %3440 = vst [vmem:[%s3295] ss:$4 sm:$0xff] %v2361
    %v3441 = vld.sshfl [vmem:[#allocation1] sm:$0xff pattern:$0x73625140]
    %3442 = vst [vmem:[%s3298] ss:$4 sm:$0xff] %v2535
    %3443 = vst [vmem:[%s3300] ss:$4 sm:$0xff] %v2541
    %3444 = vst [vmem:[%s3302] ss:$4 sm:$0xff] %v2547
    %3445 = vst [vmem:[%s3304] ss:$4 sm:$0xff] %v2553
    %v3446 = vld.sshfl [vmem:[#allocation1 + $0x20] sm:$0xff pattern:$0x73625140]
    %3447 = vst [vmem:[#allocation1] ss:$4 sm:$0xff] %v2727
    %3448 = vst [vmem:[%s3291] ss:$4 sm:$0xff] %v2733
    %3449 = vst [vmem:[%s3293] ss:$4 sm:$0xff] %v2739
    %3450 = vst [vmem:[%s3295] ss:$4 sm:$0xff] %v2745
    %v3451 = vld.sshfl [vmem:[#allocation1] sm:$0xff pattern:$0x73625140]
    %3452 = vst [vmem:[%s3298] ss:$4 sm:$0xff] %v2919
    %3453 = vst [vmem:[%s3300] ss:$4 sm:$0xff] %v2925
    %3454 = vst [vmem:[%s3302] ss:$4 sm:$0xff] %v2931
    %3455 = vst [vmem:[%s3304] ss:$4 sm:$0xff] %v2937
    %v3456 = vld.sshfl [vmem:[#allocation1 + $0x20] sm:$0xff pattern:$0x73625140]
    %3457 = vst [vmem:[#allocation1] ss:$4 sm:$0xff] %v1599
    %3458 = vst [vmem:[%s3291] ss:$4 sm:$0xff] %v1605
    %3459 = vst [vmem:[%s3293] ss:$4 sm:$0xff] %v1611
    %3460 = vst [vmem:[%s3295] ss:$4 sm:$0xff] %v1617
    %v3461 = vld.sshfl [vmem:[#allocation1] sm:$0xff pattern:$0x73625140]
    %3462 = vst [vmem:[%s3298] ss:$4 sm:$0xff] %v1791
    %3463 = vst [vmem:[%s3300] ss:$4 sm:$0xff] %v1797
    %3464 = vst [vmem:[%s3302] ss:$4 sm:$0xff] %v1803
    %3465 = vst [vmem:[%s3304] ss:$4 sm:$0xff] %v1809
    %v3466 = vld.sshfl [vmem:[#allocation1 + $0x20] sm:$0xff pattern:$0x73625140]
    %3467 = vst [vmem:[#allocation1] ss:$4 sm:$0xff] %v1983
    %3468 = vst [vmem:[%s3291] ss:$4 sm:$0xff] %v1989
    %3469 = vst [vmem:[%s3293] ss:$4 sm:$0xff] %v1995
    %3470 = vst [vmem:[%s3295] ss:$4 sm:$0xff] %v2001
    %v3471 = vld.sshfl [vmem:[#allocation1] sm:$0xff pattern:$0x73625140]
    %3472 = vst [vmem:[%s3298] ss:$4 sm:$0xff] %v2175
    %3473 = vst [vmem:[%s3300] ss:$4 sm:$0xff] %v2181
    %3474 = vst [vmem:[%s3302] ss:$4 sm:$0xff] %v2187
    %3475 = vst [vmem:[%s3304] ss:$4 sm:$0xff] %v2193
    %v3476 = vld.sshfl [vmem:[#allocation1 + $0x20] sm:$0xff pattern:$0x73625140]
    %3477 = vst [vmem:[#allocation1] ss:$4 sm:$0xff] %v2367
    %3478 = vst [vmem:[%s3291] ss:$4 sm:$0xff] %v2373
    %3479 = vst [vmem:[%s3293] ss:$4 sm:$0xff] %v2379
    %3480 = vst [vmem:[%s3295] ss:$4 sm:$0xff] %v2385
    %v3481 = vld.sshfl [vmem:[#allocation1] sm:$0xff pattern:$0x73625140]
    %3482 = vst [vmem:[%s3298] ss:$4 sm:$0xff] %v2559
    %3483 = vst [vmem:[%s3300] ss:$4 sm:$0xff] %v2565
    %3484 = vst [vmem:[%s3302] ss:$4 sm:$0xff] %v2571
    %3485 = vst [vmem:[%s3304] ss:$4 sm:$0xff] %v2577
    %v3486 = vld.sshfl [vmem:[#allocation1 + $0x20] sm:$0xff pattern:$0x73625140]
    %3487 = vst [vmem:[#allocation1] ss:$4 sm:$0xff] %v2751
    %3488 = vst [vmem:[%s3291] ss:$4 sm:$0xff] %v2757
    %3489 = vst [vmem:[%s3293] ss:$4 sm:$0xff] %v2763
    %3490 = vst [vmem:[%s3295] ss:$4 sm:$0xff] %v2769
    %v3491 = vld.sshfl [vmem:[#allocation1] sm:$0xff pattern:$0x73625140]
    %3492 = vst [vmem:[%s3298] ss:$4 sm:$0xff] %v2943
    %3493 = vst [vmem:[%s3300] ss:$4 sm:$0xff] %v2949
    %3494 = vst [vmem:[%s3302] ss:$4 sm:$0xff] %v2955
    %3495 = vst [vmem:[%s3304] ss:$4 sm:$0xff] %v2961
    %v3496 = vld.sshfl [vmem:[#allocation1 + $0x20] sm:$0xff pattern:$0x73625140]
    %3497 = vst [vmem:[#allocation1] ss:$4 sm:$0xff] %v1623
    %3498 = vst [vmem:[%s3291] ss:$4 sm:$0xff] %v1629
    %3499 = vst [vmem:[%s3293] ss:$4 sm:$0xff] %v1635
    %3500 = vst [vmem:[%s3295] ss:$4 sm:$0xff] %v1641
    %v3501 = vld.sshfl [vmem:[#allocation1] sm:$0xff pattern:$0x73625140]
    %3502 = vst [vmem:[%s3298] ss:$4 sm:$0xff] %v1815
    %3503 = vst [vmem:[%s3300] ss:$4 sm:$0xff] %v1821
    %3504 = vst [vmem:[%s3302] ss:$4 sm:$0xff] %v1827
    %3505 = vst [vmem:[%s3304] ss:$4 sm:$0xff] %v1833
    %v3506 = vld.sshfl [vmem:[#allocation1 + $0x20] sm:$0xff pattern:$0x73625140]
    %3507 = vst [vmem:[#allocation1] ss:$4 sm:$0xff] %v2007
    %3508 = vst [vmem:[%s3291] ss:$4 sm:$0xff] %v2013
    %3509 = vst [vmem:[%s3293] ss:$4 sm:$0xff] %v2019
    %3510 = vst [vmem:[%s3295] ss:$4 sm:$0xff] %v2025
    %v3511 = vld.sshfl [vmem:[#allocation1] sm:$0xff pattern:$0x73625140]
    %3512 = vst [vmem:[%s3298] ss:$4 sm:$0xff] %v2199
    %3513 = vst [vmem:[%s3300] ss:$4 sm:$0xff] %v2205
    %3514 = vst [vmem:[%s3302] ss:$4 sm:$0xff] %v2211
    %3515 = vst [vmem:[%s3304] ss:$4 sm:$0xff] %v2217
    %v3516 = vld.sshfl [vmem:[#allocation1 + $0x20] sm:$0xff pattern:$0x73625140]
    %3517 = vst [vmem:[#allocation1] ss:$4 sm:$0xff] %v2391
    %3518 = vst [vmem:[%s3291] ss:$4 sm:$0xff] %v2397
    %3519 = vst [vmem:[%s3293] ss:$4 sm:$0xff] %v2403
    %3520 = vst [vmem:[%s3295] ss:$4 sm:$0xff] %v2409
    %v3521 = vld.sshfl [vmem:[#allocation1] sm:$0xff pattern:$0x73625140]
    %3522 = vst [vmem:[%s3298] ss:$4 sm:$0xff] %v2583
    %3523 = vst [vmem:[%s3300] ss:$4 sm:$0xff] %v2589
    %3524 = vst [vmem:[%s3302] ss:$4 sm:$0xff] %v2595
    %3525 = vst [vmem:[%s3304] ss:$4 sm:$0xff] %v2601
    %v3526 = vld.sshfl [vmem:[#allocation1 + $0x20] sm:$0xff pattern:$0x73625140]
    %3527 = vst [vmem:[#allocation1] ss:$4 sm:$0xff] %v2775
    %3528 = vst [vmem:[%s3291] ss:$4 sm:$0xff] %v2781
    %3529 = vst [vmem:[%s3293] ss:$4 sm:$0xff] %v2787
    %3530 = vst [vmem:[%s3295] ss:$4 sm:$0xff] %v2793
    %v3531 = vld.sshfl [vmem:[#allocation1] sm:$0xff pattern:$0x73625140]
    %3532 = vst [vmem:[%s3298] ss:$4 sm:$0xff] %v2967
    %3533 = vst [vmem:[%s3300] ss:$4 sm:$0xff] %v2973
    %3534 = vst [vmem:[%s3302] ss:$4 sm:$0xff] %v2979
    %3535 = vst [vmem:[%s3304] ss:$4 sm:$0xff] %v2985
    %v3536 = vld.sshfl [vmem:[#allocation1 + $0x20] sm:$0xff pattern:$0x73625140]
    %3537 = vst [vmem:[#allocation1] ss:$4 sm:$0xff] %v1647
    %3538 = vst [vmem:[%s3291] ss:$4 sm:$0xff] %v1653
    %3539 = vst [vmem:[%s3293] ss:$4 sm:$0xff] %v1659
    %3540 = vst [vmem:[%s3295] ss:$4 sm:$0xff] %v1665
    %v3541 = vld.sshfl [vmem:[#allocation1] sm:$0xff pattern:$0x73625140]
    %3542 = vst [vmem:[%s3298] ss:$4 sm:$0xff] %v1839
    %3543 = vst [vmem:[%s3300] ss:$4 sm:$0xff] %v1845
    %3544 = vst [vmem:[%s3302] ss:$4 sm:$0xff] %v1851
    %3545 = vst [vmem:[%s3304] ss:$4 sm:$0xff] %v1857
    %v3546 = vld.sshfl [vmem:[#allocation1 + $0x20] sm:$0xff pattern:$0x73625140]
    %3547 = vst [vmem:[#allocation1] ss:$4 sm:$0xff] %v2031
    %3548 = vst [vmem:[%s3291] ss:$4 sm:$0xff] %v2037
    %3549 = vst [vmem:[%s3293] ss:$4 sm:$0xff] %v2043
    %3550 = vst [vmem:[%s3295] ss:$4 sm:$0xff] %v2049
    %v3551 = vld.sshfl [vmem:[#allocation1] sm:$0xff pattern:$0x73625140]
    %3552 = vst [vmem:[%s3298] ss:$4 sm:$0xff] %v2223
    %3553 = vst [vmem:[%s3300] ss:$4 sm:$0xff] %v2229
    %3554 = vst [vmem:[%s3302] ss:$4 sm:$0xff] %v2235
    %3555 = vst [vmem:[%s3304] ss:$4 sm:$0xff] %v2241
    %v3556 = vld.sshfl [vmem:[#allocation1 + $0x20] sm:$0xff pattern:$0x73625140]
    %3557 = vst [vmem:[#allocation1] ss:$4 sm:$0xff] %v2415
    %3558 = vst [vmem:[%s3291] ss:$4 sm:$0xff] %v2421
    %3559 = vst [vmem:[%s3293] ss:$4 sm:$0xff] %v2427
    %3560 = vst [vmem:[%s3295] ss:$4 sm:$0xff] %v2433
    %v3561 = vld.sshfl [vmem:[#allocation1] sm:$0xff pattern:$0x73625140]
    %3562 = vst [vmem:[%s3298] ss:$4 sm:$0xff] %v2607
    %3563 = vst [vmem:[%s3300] ss:$4 sm:$0xff] %v2613
    %3564 = vst [vmem:[%s3302] ss:$4 sm:$0xff] %v2619
    %3565 = vst [vmem:[%s3304] ss:$4 sm:$0xff] %v2625
    %v3566 = vld.sshfl [vmem:[#allocation1 + $0x20] sm:$0xff pattern:$0x73625140]
    %3567 = vst [vmem:[#allocation1] ss:$4 sm:$0xff] %v2799
    %3568 = vst [vmem:[%s3291] ss:$4 sm:$0xff] %v2805
    %3569 = vst [vmem:[%s3293] ss:$4 sm:$0xff] %v2811
    %3570 = vst [vmem:[%s3295] ss:$4 sm:$0xff] %v2817
    %v3571 = vld.sshfl [vmem:[#allocation1] sm:$0xff pattern:$0x73625140]
    %3572 = vst [vmem:[%s3298] ss:$4 sm:$0xff] %v2991
    %3573 = vst [vmem:[%s3300] ss:$4 sm:$0xff] %v2997
    %3574 = vst [vmem:[%s3302] ss:$4 sm:$0xff] %v3003
    %3575 = vst [vmem:[%s3304] ss:$4 sm:$0xff] %v3009
    %v3576 = vld.sshfl [vmem:[#allocation1 + $0x20] sm:$0xff pattern:$0x73625140]
    %3577 = vst [vmem:[#allocation1] ss:$4 sm:$0xff] %v1671
    %3578 = vst [vmem:[%s3291] ss:$4 sm:$0xff] %v1677
    %3579 = vst [vmem:[%s3293] ss:$4 sm:$0xff] %v1683
    %3580 = vst [vmem:[%s3295] ss:$4 sm:$0xff] %v1689
    %v3581 = vld.sshfl [vmem:[#allocation1] sm:$0xff pattern:$0x73625140]
    %3582 = vst [vmem:[%s3298] ss:$4 sm:$0xff] %v1863
    %3583 = vst [vmem:[%s3300] ss:$4 sm:$0xff] %v1869
    %3584 = vst [vmem:[%s3302] ss:$4 sm:$0xff] %v1875
    %3585 = vst [vmem:[%s3304] ss:$4 sm:$0xff] %v1881
    %v3586 = vld.sshfl [vmem:[#allocation1 + $0x20] sm:$0xff pattern:$0x73625140]
    %3587 = vst [vmem:[#allocation1] ss:$4 sm:$0xff] %v2055
    %3588 = vst [vmem:[%s3291] ss:$4 sm:$0xff] %v2061
    %3589 = vst [vmem:[%s3293] ss:$4 sm:$0xff] %v2067
    %3590 = vst [vmem:[%s3295] ss:$4 sm:$0xff] %v2073
    %v3591 = vld.sshfl [vmem:[#allocation1] sm:$0xff pattern:$0x73625140]
    %3592 = vst [vmem:[%s3298] ss:$4 sm:$0xff] %v2247
    %3593 = vst [vmem:[%s3300] ss:$4 sm:$0xff] %v2253
    %3594 = vst [vmem:[%s3302] ss:$4 sm:$0xff] %v2259
    %3595 = vst [vmem:[%s3304] ss:$4 sm:$0xff] %v2265
    %v3596 = vld.sshfl [vmem:[#allocation1 + $0x20] sm:$0xff pattern:$0x73625140]
    %3597 = vst [vmem:[#allocation1] ss:$4 sm:$0xff] %v2439
    %3598 = vst [vmem:[%s3291] ss:$4 sm:$0xff] %v2445
    %3599 = vst [vmem:[%s3293] ss:$4 sm:$0xff] %v2451
    %3600 = vst [vmem:[%s3295] ss:$4 sm:$0xff] %v2457
    %v3601 = vld.sshfl [vmem:[#allocation1] sm:$0xff pattern:$0x73625140]
    %3602 = vst [vmem:[%s3298] ss:$4 sm:$0xff] %v2631
    %3603 = vst [vmem:[%s3300] ss:$4 sm:$0xff] %v2637
    %3604 = vst [vmem:[%s3302] ss:$4 sm:$0xff] %v2643
    %3605 = vst [vmem:[%s3304] ss:$4 sm:$0xff] %v2649
    %v3606 = vld.sshfl [vmem:[#allocation1 + $0x20] sm:$0xff pattern:$0x73625140]
    %3607 = vst [vmem:[#allocation1] ss:$4 sm:$0xff] %v2823
    %3608 = vst [vmem:[%s3291] ss:$4 sm:$0xff] %v2829
    %3609 = vst [vmem:[%s3293] ss:$4 sm:$0xff] %v2835
    %3610 = vst [vmem:[%s3295] ss:$4 sm:$0xff] %v2841
    %v3611 = vld.sshfl [vmem:[#allocation1] sm:$0xff pattern:$0x73625140]
    %3612 = vst [vmem:[%s3298] ss:$4 sm:$0xff] %v3015
    %3613 = vst [vmem:[%s3300] ss:$4 sm:$0xff] %v3021
    %3614 = vst [vmem:[%s3302] ss:$4 sm:$0xff] %v3027
    %3615 = vst [vmem:[%s3304] ss:$4 sm:$0xff] %v3033
    %v3616 = vld.sshfl [vmem:[#allocation1 + $0x20] sm:$0xff pattern:$0x73625140]
    %3617 = vset.pattern.permute.xlu0 0
    %3618 = vperm.xlu0 %3617, %v3297
    %v3619 = vpop.permute.xlu0 %3618
    %3620 = vset.pattern.permute.xlu0 0
    %3621 = vperm.xlu0 %3620, %v3306
    %v3622 = vpop.permute.xlu0 %3621
    %3623 = vset.pattern.permute.xlu0 0
    %3624 = vperm.xlu0 %3623, %v3311
    %v3625 = vpop.permute.xlu0 %3624
    %3626 = vset.pattern.permute.xlu0 0
    %3627 = vperm.xlu0 %3626, %v3316
    %v3628 = vpop.permute.xlu0 %3627
    %3629 = vset.pattern.permute.xlu0 0
    %3630 = vperm.xlu0 %3629, %v3321
    %v3631 = vpop.permute.xlu0 %3630
    %3632 = vset.pattern.permute.xlu0 0
    %3633 = vperm.xlu0 %3632, %v3326
    %v3634 = vpop.permute.xlu0 %3633
    %3635 = vset.pattern.permute.xlu0 0
    %3636 = vperm.xlu0 %3635, %v3331
    %v3637 = vpop.permute.xlu0 %3636
    %3638 = vset.pattern.permute.xlu0 0
    %3639 = vperm.xlu0 %3638, %v3336
    %v3640 = vpop.permute.xlu0 %3639
    %3641 = vset.pattern.permute.xlu0 0
    %3642 = vperm.xlu0 %3641, %v3341
    %v3643 = vpop.permute.xlu0 %3642
    %3644 = vset.pattern.permute.xlu0 0
    %3645 = vperm.xlu0 %3644, %v3346
    %v3646 = vpop.permute.xlu0 %3645
    %3647 = vset.pattern.permute.xlu0 0
    %3648 = vperm.xlu0 %3647, %v3351
    %v3649 = vpop.permute.xlu0 %3648
    %3650 = vset.pattern.permute.xlu0 0
    %3651 = vperm.xlu0 %3650, %v3356
    %v3652 = vpop.permute.xlu0 %3651
    %3653 = vset.pattern.permute.xlu0 0
    %3654 = vperm.xlu0 %3653, %v3361
    %v3655 = vpop.permute.xlu0 %3654
    %3656 = vset.pattern.permute.xlu0 0
    %3657 = vperm.xlu0 %3656, %v3366
    %v3658 = vpop.permute.xlu0 %3657
    %3659 = vset.pattern.permute.xlu0 0
    %3660 = vperm.xlu0 %3659, %v3371
    %v3661 = vpop.permute.xlu0 %3660
    %3662 = vset.pattern.permute.xlu0 0
    %3663 = vperm.xlu0 %3662, %v3376
    %v3664 = vpop.permute.xlu0 %3663
    %3665 = vset.pattern.permute.xlu0 0
    %3666 = vperm.xlu0 %3665, %v3381
    %v3667 = vpop.permute.xlu0 %3666
    %3668 = vset.pattern.permute.xlu0 0
    %3669 = vperm.xlu0 %3668, %v3386
    %v3670 = vpop.permute.xlu0 %3669
    %3671 = vset.pattern.permute.xlu0 0
    %3672 = vperm.xlu0 %3671, %v3391
    %v3673 = vpop.permute.xlu0 %3672
    %3674 = vset.pattern.permute.xlu0 0
    %3675 = vperm.xlu0 %3674, %v3396
    %v3676 = vpop.permute.xlu0 %3675
    %3677 = vset.pattern.permute.xlu0 0
    %3678 = vperm.xlu0 %3677, %v3401
    %v3679 = vpop.permute.xlu0 %3678
    %3680 = vset.pattern.permute.xlu0 0
    %3681 = vperm.xlu0 %3680, %v3406
    %v3682 = vpop.permute.xlu0 %3681
    %3683 = vset.pattern.permute.xlu0 0
    %3684 = vperm.xlu0 %3683, %v3411
    %v3685 = vpop.permute.xlu0 %3684
    %3686 = vset.pattern.permute.xlu0 0
    %3687 = vperm.xlu0 %3686, %v3416
    %v3688 = vpop.permute.xlu0 %3687
    %3689 = vset.pattern.permute.xlu0 0
    %3690 = vperm.xlu0 %3689, %v3421
    %v3691 = vpop.permute.xlu0 %3690
    %3692 = vset.pattern.permute.xlu0 0
    %3693 = vperm.xlu0 %3692, %v3426
    %v3694 = vpop.permute.xlu0 %3693
    %3695 = vset.pattern.permute.xlu0 0
    %3696 = vperm.xlu0 %3695, %v3431
    %v3697 = vpop.permute.xlu0 %3696
    %3698 = vset.pattern.permute.xlu0 0
    %3699 = vperm.xlu0 %3698, %v3436
    %v3700 = vpop.permute.xlu0 %3699
    %3701 = vset.pattern.permute.xlu0 0
    %3702 = vperm.xlu0 %3701, %v3441
    %v3703 = vpop.permute.xlu0 %3702
    %3704 = vset.pattern.permute.xlu0 0
    %3705 = vperm.xlu0 %3704, %v3446
    %v3706 = vpop.permute.xlu0 %3705
    %3707 = vset.pattern.permute.xlu0 0
    %3708 = vperm.xlu0 %3707, %v3451
    %v3709 = vpop.permute.xlu0 %3708
    %3710 = vset.pattern.permute.xlu0 0
    %3711 = vperm.xlu0 %3710, %v3456
    %v3712 = vpop.permute.xlu0 %3711
    %3713 = vset.pattern.permute.xlu0 0
    %3714 = vperm.xlu0 %3713, %v3461
    %v3715 = vpop.permute.xlu0 %3714
    %3716 = vset.pattern.permute.xlu0 0
    %3717 = vperm.xlu0 %3716, %v3466
    %v3718 = vpop.permute.xlu0 %3717
    %3719 = vset.pattern.permute.xlu0 0
    %3720 = vperm.xlu0 %3719, %v3471
    %v3721 = vpop.permute.xlu0 %3720
    %3722 = vset.pattern.permute.xlu0 0
    %3723 = vperm.xlu0 %3722, %v3476
    %v3724 = vpop.permute.xlu0 %3723
    %3725 = vset.pattern.permute.xlu0 0
    %3726 = vperm.xlu0 %3725, %v3481
    %v3727 = vpop.permute.xlu0 %3726
    %3728 = vset.pattern.permute.xlu0 0
    %3729 = vperm.xlu0 %3728, %v3486
    %v3730 = vpop.permute.xlu0 %3729
    %3731 = vset.pattern.permute.xlu0 0
    %3732 = vperm.xlu0 %3731, %v3491
    %v3733 = vpop.permute.xlu0 %3732
    %3734 = vset.pattern.permute.xlu0 0
    %3735 = vperm.xlu0 %3734, %v3496
    %v3736 = vpop.permute.xlu0 %3735
    %3737 = vset.pattern.permute.xlu0 0
    %3738 = vperm.xlu0 %3737, %v3501
    %v3739 = vpop.permute.xlu0 %3738
    %3740 = vset.pattern.permute.xlu0 0
    %3741 = vperm.xlu0 %3740, %v3506
    %v3742 = vpop.permute.xlu0 %3741
    %3743 = vset.pattern.permute.xlu0 0
    %3744 = vperm.xlu0 %3743, %v3511
    %v3745 = vpop.permute.xlu0 %3744
    %3746 = vset.pattern.permute.xlu0 0
    %3747 = vperm.xlu0 %3746, %v3516
    %v3748 = vpop.permute.xlu0 %3747
    %3749 = vset.pattern.permute.xlu0 0
    %3750 = vperm.xlu0 %3749, %v3521
    %v3751 = vpop.permute.xlu0 %3750
    %3752 = vset.pattern.permute.xlu0 0
    %3753 = vperm.xlu0 %3752, %v3526
    %v3754 = vpop.permute.xlu0 %3753
    %3755 = vset.pattern.permute.xlu0 0
    %3756 = vperm.xlu0 %3755, %v3531
    %v3757 = vpop.permute.xlu0 %3756
    %3758 = vset.pattern.permute.xlu0 0
    %3759 = vperm.xlu0 %3758, %v3536
    %v3760 = vpop.permute.xlu0 %3759
    %3761 = vset.pattern.permute.xlu0 0
    %3762 = vperm.xlu0 %3761, %v3541
    %v3763 = vpop.permute.xlu0 %3762
    %3764 = vset.pattern.permute.xlu0 0
    %3765 = vperm.xlu0 %3764, %v3546
    %v3766 = vpop.permute.xlu0 %3765
    %3767 = vset.pattern.permute.xlu0 0
    %3768 = vperm.xlu0 %3767, %v3551
    %v3769 = vpop.permute.xlu0 %3768
    %3770 = vset.pattern.permute.xlu0 0
    %3771 = vperm.xlu0 %3770, %v3556
    %v3772 = vpop.permute.xlu0 %3771
    %3773 = vset.pattern.permute.xlu0 0
    %3774 = vperm.xlu0 %3773, %v3561
    %v3775 = vpop.permute.xlu0 %3774
    %3776 = vset.pattern.permute.xlu0 0
    %3777 = vperm.xlu0 %3776, %v3566
    %v3778 = vpop.permute.xlu0 %3777
    %3779 = vset.pattern.permute.xlu0 0
    %3780 = vperm.xlu0 %3779, %v3571
    %v3781 = vpop.permute.xlu0 %3780
    %3782 = vset.pattern.permute.xlu0 0
    %3783 = vperm.xlu0 %3782, %v3576
    %v3784 = vpop.permute.xlu0 %3783
    %3785 = vset.pattern.permute.xlu0 0
    %3786 = vperm.xlu0 %3785, %v3581
    %v3787 = vpop.permute.xlu0 %3786
    %3788 = vset.pattern.permute.xlu0 0
    %3789 = vperm.xlu0 %3788, %v3586
    %v3790 = vpop.permute.xlu0 %3789
    %3791 = vset.pattern.permute.xlu0 0
    %3792 = vperm.xlu0 %3791, %v3591
    %v3793 = vpop.permute.xlu0 %3792
    %3794 = vset.pattern.permute.xlu0 0
    %3795 = vperm.xlu0 %3794, %v3596
    %v3796 = vpop.permute.xlu0 %3795
    %3797 = vset.pattern.permute.xlu0 0
    %3798 = vperm.xlu0 %3797, %v3601
    %v3799 = vpop.permute.xlu0 %3798
    %3800 = vset.pattern.permute.xlu0 0
    %3801 = vperm.xlu0 %3800, %v3606
    %v3802 = vpop.permute.xlu0 %3801
    %3803 = vset.pattern.permute.xlu0 0
    %3804 = vperm.xlu0 %3803, %v3611
    %v3805 = vpop.permute.xlu0 %3804
    %3806 = vset.pattern.permute.xlu0 0
    %3807 = vperm.xlu0 %3806, %v3616
    %v3808 = vpop.permute.xlu0 %3807
    %v3809 = vlaneseq
    %v3810 = vand.u32 %v3809, 127
    %v3811 = vperm.slane %v3619, %v3810
    %v3812 = vperm.slane %v3622, %v3810
    %v3813 = vperm.slane %v3625, %v3810
    %v3814 = vperm.slane %v3628, %v3810
    %v3815 = vperm.slane %v3631, %v3810
    %v3816 = vperm.slane %v3634, %v3810
    %v3817 = vperm.slane %v3637, %v3810
    %v3818 = vperm.slane %v3640, %v3810
    %v3819 = vperm.slane %v3643, %v3810
    %v3820 = vperm.slane %v3646, %v3810
    %v3821 = vperm.slane %v3649, %v3810
    %v3822 = vperm.slane %v3652, %v3810
    %v3823 = vperm.slane %v3655, %v3810
    %v3824 = vperm.slane %v3658, %v3810
    %v3825 = vperm.slane %v3661, %v3810
    %v3826 = vperm.slane %v3664, %v3810
    %v3827 = vperm.slane %v3667, %v3810
    %v3828 = vperm.slane %v3670, %v3810
    %v3829 = vperm.slane %v3673, %v3810
    %v3830 = vperm.slane %v3676, %v3810
    %v3831 = vperm.slane %v3679, %v3810
    %v3832 = vperm.slane %v3682, %v3810
    %v3833 = vperm.slane %v3685, %v3810
    %v3834 = vperm.slane %v3688, %v3810
    %v3835 = vperm.slane %v3691, %v3810
    %v3836 = vperm.slane %v3694, %v3810
    %v3837 = vperm.slane %v3697, %v3810
    %v3838 = vperm.slane %v3700, %v3810
    %v3839 = vperm.slane %v3703, %v3810
    %v3840 = vperm.slane %v3706, %v3810
    %v3841 = vperm.slane %v3709, %v3810
    %v3842 = vperm.slane %v3712, %v3810
    %v3843 = vperm.slane %v3715, %v3810
    %v3844 = vperm.slane %v3718, %v3810
    %v3845 = vperm.slane %v3721, %v3810
    %v3846 = vperm.slane %v3724, %v3810
    %v3847 = vperm.slane %v3727, %v3810
    %v3848 = vperm.slane %v3730, %v3810
    %v3849 = vperm.slane %v3733, %v3810
    %v3850 = vperm.slane %v3736, %v3810
    %v3851 = vperm.slane %v3739, %v3810
    %v3852 = vperm.slane %v3742, %v3810
    %v3853 = vperm.slane %v3745, %v3810
    %v3854 = vperm.slane %v3748, %v3810
    %v3855 = vperm.slane %v3751, %v3810
    %v3856 = vperm.slane %v3754, %v3810
    %v3857 = vperm.slane %v3757, %v3810
    %v3858 = vperm.slane %v3760, %v3810
    %v3859 = vperm.slane %v3763, %v3810
    %v3860 = vperm.slane %v3766, %v3810
    %v3861 = vperm.slane %v3769, %v3810
    %v3862 = vperm.slane %v3772, %v3810
    %v3863 = vperm.slane %v3775, %v3810
    %v3864 = vperm.slane %v3778, %v3810
    %v3865 = vperm.slane %v3781, %v3810
    %v3866 = vperm.slane %v3784, %v3810
    %v3867 = vperm.slane %v3787, %v3810
    %v3868 = vperm.slane %v3790, %v3810
    %v3869 = vperm.slane %v3793, %v3810
    %v3870 = vperm.slane %v3796, %v3810
    %v3871 = vperm.slane %v3799, %v3810
    %v3872 = vperm.slane %v3802, %v3810
    %v3873 = vperm.slane %v3805, %v3810
    %v3874 = vperm.slane %v3808, %v3810
    %vm3875 = vcmask 1041409
    %v3876 = vsel %vm3875, %v3812, %v3811
    %vm3877 = vcmask 1042434
    %v3878 = vsel %vm3877, %v3813, %v3876
    %vm3879 = vcmask 1043459
    %v3880 = vsel %vm3879, %v3814, %v3878
    %vm3881 = vcmask 1044484
    %v3882 = vsel %vm3881, %v3815, %v3880
    %vm3883 = vcmask 1045509
    %v3884 = vsel %vm3883, %v3816, %v3882
    %vm3885 = vcmask 1046534
    %v3886 = vsel %vm3885, %v3817, %v3884
    %vm3887 = vcmask 1047559
    %v3888 = vsel %vm3887, %v3818, %v3886
    %v3889 = vsel %vm3875, %v3820, %v3819
    %v3890 = vsel %vm3877, %v3821, %v3889
    %v3891 = vsel %vm3879, %v3822, %v3890
    %v3892 = vsel %vm3881, %v3823, %v3891
    %v3893 = vsel %vm3883, %v3824, %v3892
    %v3894 = vsel %vm3885, %v3825, %v3893
    %v3895 = vsel %vm3887, %v3826, %v3894
    %v3896 = vsel %vm3875, %v3828, %v3827
    %v3897 = vsel %vm3877, %v3829, %v3896
    %v3898 = vsel %vm3879, %v3830, %v3897
    %v3899 = vsel %vm3881, %v3831, %v3898
    %v3900 = vsel %vm3883, %v3832, %v3899
    %v3901 = vsel %vm3885, %v3833, %v3900
    %v3902 = vsel %vm3887, %v3834, %v3901
    %v3903 = vsel %vm3875, %v3836, %v3835
    %v3904 = vsel %vm3877, %v3837, %v3903
    %v3905 = vsel %vm3879, %v3838, %v3904
    %v3906 = vsel %vm3881, %v3839, %v3905
    %v3907 = vsel %vm3883, %v3840, %v3906
    %v3908 = vsel %vm3885, %v3841, %v3907
    %v3909 = vsel %vm3887, %v3842, %v3908
    %v3910 = vsel %vm3875, %v3844, %v3843
    %v3911 = vsel %vm3877, %v3845, %v3910
    %v3912 = vsel %vm3879, %v3846, %v3911
    %v3913 = vsel %vm3881, %v3847, %v3912
    %v3914 = vsel %vm3883, %v3848, %v3913
    %v3915 = vsel %vm3885, %v3849, %v3914
    %v3916 = vsel %vm3887, %v3850, %v3915
    %v3917 = vsel %vm3875, %v3852, %v3851
    %v3918 = vsel %vm3877, %v3853, %v3917
    %v3919 = vsel %vm3879, %v3854, %v3918
    %v3920 = vsel %vm3881, %v3855, %v3919
    %v3921 = vsel %vm3883, %v3856, %v3920
    %v3922 = vsel %vm3885, %v3857, %v3921
    %v3923 = vsel %vm3887, %v3858, %v3922
    %v3924 = vsel %vm3875, %v3860, %v3859
    %v3925 = vsel %vm3877, %v3861, %v3924
    %v3926 = vsel %vm3879, %v3862, %v3925
    %v3927 = vsel %vm3881, %v3863, %v3926
    %v3928 = vsel %vm3883, %v3864, %v3927
    %v3929 = vsel %vm3885, %v3865, %v3928
    %v3930 = vsel %vm3887, %v3866, %v3929
    %v3931 = vsel %vm3875, %v3868, %v3867
    %v3932 = vsel %vm3877, %v3869, %v3931
    %v3933 = vsel %vm3879, %v3870, %v3932
    %v3934 = vsel %vm3881, %v3871, %v3933
    %v3935 = vsel %vm3883, %v3872, %v3934
    %v3936 = vsel %vm3885, %v3873, %v3935
    %v3937 = vsel %vm3887, %v3874, %v3936
    %vm3946 = vcmask 64512
    %3947 = vst.msk [vmem:[#allocation5] sm:$0xff] %vm3946, %v3888
    %3948 = vst.msk [vmem:[#allocation5 + $0x8] sm:$0xff] %vm3946, %v3895
    %3949 = vst.msk [vmem:[#allocation5 + $0x10] sm:$0xff] %vm3946, %v3902
    %3950 = vst.msk [vmem:[#allocation5 + $0x18] sm:$0xff] %vm3946, %v3909
    %3951 = vst.msk [vmem:[#allocation5 + $0x20] sm:$0xff] %vm3946, %v3916
    %3952 = vst.msk [vmem:[#allocation5 + $0x28] sm:$0xff] %vm3946, %v3923
    %3953 = vst.msk [vmem:[#allocation5 + $0x30] sm:$0xff] %vm3946, %v3930
    %3954 = vst.msk [vmem:[#allocation5 + $0x38] sm:$0xff] %vm3946, %v3937
    // Predicated region
    $region10: #{tpu_custom_call.1} parent=1 // pred_check
      _
    $region11: #{tpu_custom_call.1} parent=1 // pred_check_branch
      %3956 = sbr.rel (0) target = $region13
    $region12: #{tpu_custom_call.1} parent=1 // pred_region
      %3958 = vsyncadd [#allocation4], 0
      %s3959 = sshll.u32 [#allocation5], 4
      %s3960 = int_to_ptr.vmem [resolvable:$true] %s3959
      %s3961 = sshll.u32 %s1, 4
      %s3962 = int_to_ptr.hbm [resolvable:$true] %s3961
      %3967 = dma.vmem_to_hbm [thread:$0]  %s3960, 1024, %s3962, [#allocation4], 128, 128, 8
    $region13: #{tpu_custom_call.1} parent=1 // pred_fallthru
      _
    // Predicated region
    $region14: #{tpu_custom_call.1} parent=1 // pred_check
      _
    $region15: #{tpu_custom_call.1} parent=1 // pred_check_branch
      %3969 = sbr.rel (0) target = $region17
    $region16: #{tpu_custom_call.1} parent=1 // pred_region
      %3971 = dma.done [#allocation4], 1024
    $region17: #{tpu_custom_call.1} parent=1 // pred_fallthru
      _
    %3972 = vsyncpa [#allocation3], 1
    %3973 = vsyncpa [#allocation4], 1

</llo_original>
